<compile_context>
chip_gen: v7x
topology: tpu7x:2x2x1
jax: 0.10.0
libtpu: 0.0.40
codegen_flags: <defaults>
</compile_context>

<pallas_src>
import functools
import math

import jax
import jax.numpy as jnp
from jax import lax
from jax.experimental import pallas as pl
from jax.experimental.pallas import tpu as pltpu

_MIB = 1024 * 1024


def _sdpa_kernel(*refs, scale, has_mask, return_attention, exact_softmax):
    q_ref, k_ref, v_ref = refs[0], refs[1], refs[2]
    i = 3
    if has_mask:
        mask_ref = refs[i]
        i += 1
    ctx_ref = refs[i]
    attn_ref = refs[i + 1] if return_attention else None

    # Fold 1/sqrt(dk) into q (TH*TQ*dk elements) rather than the (TH,TQ,Lk) scores.
    # Python-float scale is weakly typed, so q keeps its native dtype (bf16 stays bf16).
    q = q_ref[0] * scale               # (TH, TQ, dk)
    k = k_ref[0]                       # (TH, Lk, dk)
    v = v_ref[0]                       # (TH, Lk, dv)

    # similarities = q @ k^T : NT contraction over dk, batched over the head tile,
    # f32 accumulation on the MXU.
    s = lax.dot_general(q, k, (((2,), (2,)), ((0,), (0,))),
                        preferred_element_type=jnp.float32)    # (TH, TQ, Lk) f32

    if has_mask:
        keep = mask_ref[0] != 0        # (TQ, Lk), compared in the mask's own dtype
        s = jnp.where(keep[None, :, :], s, jnp.float32(-1000000000.0))

    # Numerically stable row softmax (rows are complete within a q-tile => exact).
    s_max = jnp.max(s, axis=-1, keepdims=True)
    p = jnp.exp(s - s_max)
    denom = jnp.sum(p, axis=-1, keepdims=True)                 # (TH, TQ, 1)
    if exact_softmax:
        inv = 1.0 / denom              # exact; the divide is over the tiny reduced tensor
    else:
        inv = pl.reciprocal(denom, approx=True)   # EUP; fine when attn is stored in bf16

    # Single full-tensor cast, reused for the MXU operand AND the attention store.
    attn = (p * inv).astype(ctx_ref.dtype)                     # (TH, TQ, Lk)

    # context = attn @ v, batched over the head tile, f32 accumulation.
    ctx = lax.dot_general(attn, v, (((2,), (1,)), ((0,), (0,))),
                          preferred_element_type=jnp.float32)  # (TH, TQ, dv)

    ctx_ref[0] = ctx.astype(ctx_ref.dtype)
    if return_attention:
        attn_ref[0] = attn


def _vmem_capacity_bytes():
    """Best-effort device VMEM capacity; conservative (v7x per-core) fallback."""
    try:
        info = pltpu.get_tpu_info()
        cap = getattr(info, "vmem_capacity_bytes", None)
        if cap:
            return int(cap)
    except Exception:
        pass
    return 64 * _MIB


def _select_tiles(H, Lq, Lk, dk, dv, in_isz, attn_isz, mask_isz, has_mask,
                  return_attention, kv_bufs, budget):
    """Pick (head_tile, q_tile): keep TQ as large/MXU-friendly as possible and
    shrink the head tile first when VMEM is tight (v7x)."""

    def footprint(th, tq):
        b = 0
        b += 2 * th * tq * dk * in_isz           # q input blocks (double-buffered)
        b += kv_bufs * th * Lk * dk * in_isz     # k blocks (single-buffered when supported)
        b += kv_bufs * th * Lk * dv * in_isz     # v blocks
        if has_mask:
            b += 2 * tq * Lk * mask_isz          # mask blocks
        b += 2 * th * tq * dv * in_isz           # ctx output blocks
        if return_attention:
            b += 2 * th * tq * Lk * attn_isz     # attn output blocks
        b += 4 * th * tq * Lk * 4                # f32 scores/probs/where/exp temporaries
        b += th * tq * dk * in_isz               # scaled-q temporary
        b += 2 * th * tq * dv * 4                # f32 ctx intermediate (+ cast temp)
        b += 2 * th * tq * 4                     # row max / denom
        return b

    # TQ candidates, largest first; multiples of 32 keep sub-32-bit mask tiles legal.
    tq_cands = [Lq] + [c for c in (1024, 512, 256, 128, 64, 32)
                       if c < Lq and Lq % c == 0]
    th_cands = [d for d in range(H, 0, -1) if H % d == 0]

    for tq in tq_cands:               # prefer big q-tiles ...
        for th in th_cands:           # ... and shrink the head tile first
            if footprint(th, tq) <= budget:
                return th, tq
    # Nothing fits: best-effort smallest configuration (see TODO for Lk tiling).
    return 1, tq_cands[-1]


def scaled_dot_product_attention(q, k, v, mask=None, return_attention=True,
                                 q_tile=None, head_tile=None):
    """Pallas implementation of ScaledDotProductAttention.forward.

    q: (B, H, Lq, dk), k: (B, H, Lk, dk), v: (B, H, Lk, dv)
    mask: optional (B, Lq, Lk); positions where mask == 0 get -1e9 before softmax.
    Returns (context, attention) — or just context if return_attention=False.
    """
    B, H, Lq, dk = q.shape
    Lk = k.shape[2]
    dv = v.shape[3]
    has_mask = mask is not None
    out_dtype = q.dtype

    if has_mask and mask.dtype == jnp.bool_:
        # 1-byte -> 1-byte; avoids i1 refs in the kernel.  (Float/int masks stream as-is.)
        mask = mask.astype(jnp.int8)

    in_isz = jnp.dtype(q.dtype).itemsize
    attn_isz = jnp.dtype(out_dtype).itemsize
    mask_isz = jnp.dtype(mask.dtype).itemsize if has_mask else 0

    vmem_cap = _vmem_capacity_bytes()
    # Leave headroom below physical VMEM, and keep ~12 MiB of the requested limit
    # un-budgeted for compiler internal scratch / vreg spill (critical on v7x).
    vmem_limit = max(min(vmem_cap - 16 * _MIB, 112 * _MIB), 32 * _MIB)
    budget = max(vmem_limit - 12 * _MIB, 8 * _MIB)

    single_buffer_kv = hasattr(pl, "Buffered")
    th, tq = _select_tiles(H, Lq, Lk, dk, dv, in_isz, attn_isz, mask_isz,
                           has_mask, return_attention,
                           kv_bufs=1 if single_buffer_kv else 2,
                           budget=budget)
    if q_tile is not None:
        assert Lq % q_tile == 0
        tq = q_tile
    if head_tile is not None:
        assert H % head_tile == 0
        th = head_tile

    scale = 1.0 / math.sqrt(dk)
    exact_softmax = jnp.dtype(out_dtype) == jnp.float32
    kernel = functools.partial(_sdpa_kernel, scale=scale, has_mask=has_mask,
                               return_attention=return_attention,
                               exact_softmax=exact_softmax)

    def build(use_single_buffer_kv):
        kv_kwargs = {}
        if use_single_buffer_kv:
            # K/V blocks never change across the (innermost) q-tile axis: single
            # buffering halves their VMEM footprint.
            kv_kwargs = {"pipeline_mode": pl.Buffered(1)}
        in_specs = [
            pl.BlockSpec((1, th, tq, dk), lambda b, h, t: (b, h, t, 0)),
            pl.BlockSpec((1, th, Lk, dk), lambda b, h, t: (b, h, 0, 0), **kv_kwargs),
            pl.BlockSpec((1, th, Lk, dv), lambda b, h, t: (b, h, 0, 0), **kv_kwargs),
        ]
        if has_mask:
            in_specs.append(pl.BlockSpec((1, tq, Lk), lambda b, h, t: (b, t, 0)))
        if return_attention:
            out_shape = (jax.ShapeDtypeStruct((B, H, Lq, dv), out_dtype),
                         jax.ShapeDtypeStruct((B, H, Lq, Lk), out_dtype))
            out_specs = [pl.BlockSpec((1, th, tq, dv), lambda b, h, t: (b, h, t, 0)),
                         pl.BlockSpec((1, th, tq, Lk), lambda b, h, t: (b, h, t, 0))]
        else:
            out_shape = jax.ShapeDtypeStruct((B, H, Lq, dv), out_dtype)
            out_specs = pl.BlockSpec((1, th, tq, dv), lambda b, h, t: (b, h, t, 0))
        return pl.pallas_call(
            kernel,
            out_shape=out_shape,
            grid_spec=pltpu.PrefetchScalarGridSpec(
                num_scalar_prefetch=0,
                grid=(B, H // th, Lq // tq),
                in_specs=in_specs,
                out_specs=out_specs,
            ),
            compiler_params=pltpu.CompilerParams(
                dimension_semantics=("parallel", "parallel", "parallel"),
                vmem_limit_bytes=int(vmem_limit),
            ),
        )

    args = (q, k, v, mask) if has_mask else (q, k, v)
    try:
        out = build(single_buffer_kv)(*args)
    except Exception:
        # pipeline_mode=pl.Buffered(1) unsupported in this build: fall back to
        # default double-buffered K/V (perf-only change, identical semantics).
        out = build(False)(*args)

    if return_attention:
        ctx, attn = out
        return ctx, attn
    return out


def _reference(q, k, v, mask=None):
    dk = q.shape[-1]
    s = jnp.einsum("bhqd,bhkd->bhqk", q.astype(jnp.float32),
                   k.astype(jnp.float32)) / jnp.sqrt(jnp.float32(dk))
    if mask is not None:
        s = jnp.where(mask[:, None, :, :] == 0, -1000000000.0, s)
    attn = jax.nn.softmax(s, axis=-1)
    ctx = jnp.einsum("bhqk,bhkd->bhqd", attn, v.astype(jnp.float32))
    return ctx.astype(q.dtype), attn.astype(q.dtype)


if __name__ == "__main__":
    key = jax.random.PRNGKey(0)
    kq, kk, kv, km = jax.random.split(key, 4)

    # Small shapes consistent with the module (batch=2, heads=2, seq=8, dk=dv=32).
    B, H, Lq, Lk, dk, dv = 2, 2, 8, 8, 32, 32
    q = jax.random.normal(kq, (B, H, Lq, dk), dtype=jnp.float32)
    k = jax.random.normal(kk, (B, H, Lk, dk), dtype=jnp.float32)
    v = jax.random.normal(kv, (B, H, Lk, dv), dtype=jnp.float32)
    mask = (jax.random.uniform(km, (B, Lq, Lk)) > 0.2).astype(jnp.float32)

    # Masked variant (mask streamed in its original f32 dtype).
    ctx, attn = scaled_dot_product_attention(q, k, v, mask)
    jax.block_until_ready((ctx, attn))
    ref_ctx, ref_attn = _reference(q, k, v, mask)
    assert ctx.shape == (B, H, Lq, dv) and attn.shape == (B, H, Lq, Lk)
    assert jnp.allclose(ctx, ref_ctx, atol=2e-3, rtol=2e-3)
    assert jnp.allclose(attn, ref_attn, atol=2e-3, rtol=2e-3)

    # Mask-free variant (separate compiled kernel, no mask streamed).
    ctx2, attn2 = scaled_dot_product_attention(q, k, v, None)
    jax.block_until_ready((ctx2, attn2))
    ref_ctx2, ref_attn2 = _reference(q, k, v, None)
    assert jnp.allclose(ctx2, ref_ctx2, atol=2e-3, rtol=2e-3)
    assert jnp.allclose(attn2, ref_attn2, atol=2e-3, rtol=2e-3)

    # Context-only variant (skips the (B,H,Lq,Lk) attention writeback).
    ctx3 = scaled_dot_product_attention(q, k, v, mask, return_attention=False)
    jax.block_until_ready(ctx3)
    assert jnp.allclose(ctx3, ref_ctx, atol=2e-3, rtol=2e-3)

    # Forced head/q tiling to exercise the multi-step grid with resident K/V.
    kq2, kk2, kv2, km2 = jax.random.split(jax.random.PRNGKey(0), 4)
    B2, H2, L2, d2 = 2, 2, 64, 32
    q4 = jax.random.normal(kq2, (B2, H2, L2, d2), dtype=jnp.float32)
    k4 = jax.random.normal(kk2, (B2, H2, L2, d2), dtype=jnp.float32)
    v4 = jax.random.normal(kv2, (B2, H2, L2, d2), dtype=jnp.float32)
    mask4 = (jax.random.uniform(km2, (B2, L2, L2)) > 0.2).astype(jnp.float32)
    ctx4, attn4 = scaled_dot_product_attention(q4, k4, v4, mask4,
                                               q_tile=32, head_tile=1)
    jax.block_until_ready((ctx4, attn4))
    ref_ctx4, ref_attn4 = _reference(q4, k4, v4, mask4)
    assert jnp.allclose(ctx4, ref_ctx4, atol=2e-3, rtol=2e-3)
    assert jnp.allclose(attn4, ref_attn4, atol=2e-3, rtol=2e-3)

    print("KERNEL_OK")
</pallas_src>

<mosaic_0001>
module attributes {stable_mosaic.version = 11 : i64} {
  func.func @_sdpa_kernel(%arg0: i32, %arg1: i32, %arg2: i32, %arg3: memref<1x2x8x32xf32, #tpu.memory_space<vmem>>, %arg4: memref<1x2x8x32xf32, #tpu.memory_space<vmem>>, %arg5: memref<1x2x8x32xf32, #tpu.memory_space<vmem>>, %arg6: memref<1x8x8xf32, #tpu.memory_space<vmem>>, %arg7: memref<1x2x8x32xf32, #tpu.memory_space<vmem>>, %arg8: memref<1x2x8x8xf32, #tpu.memory_space<vmem>>) attributes {dimension_semantics = [#tpu.dimension_semantics<parallel>, #tpu.dimension_semantics<parallel>, #tpu.dimension_semantics<parallel>], iteration_bounds = array<i64: 2, 1, 1>, scalar_prefetch = 0 : i64, scratch_operands = 0 : i64, tpu.core_type = #tpu.core_type<tc>, window_params = [{transform_indices = @transform_0, window_bounds = array<i64: 1, 2, 8, 32>}, {pipeline_mode = #tpu.pipeline_mode<synchronous>, transform_indices = @transform_1, window_bounds = array<i64: 1, 2, 8, 32>}, {pipeline_mode = #tpu.pipeline_mode<synchronous>, transform_indices = @transform_2, window_bounds = array<i64: 1, 2, 8, 32>}, {transform_indices = @transform_3, window_bounds = array<i64: 1, 8, 8>}, {transform_indices = @transform_4, window_bounds = array<i64: 1, 2, 8, 32>}, {transform_indices = @transform_5, window_bounds = array<i64: 1, 2, 8, 8>}]} {
    %c0 = arith.constant 0 : index
    %c0_0 = arith.constant 0 : index
    %c0_1 = arith.constant 0 : index
    %c0_2 = arith.constant 0 : index
    %0 = vector.load %arg3[%c0, %c0_0, %c0_1, %c0_2] : memref<1x2x8x32xf32, #tpu.memory_space<vmem>>, vector<1x2x8x32xf32>
    %1 = vector.shape_cast %0 : vector<1x2x8x32xf32> to vector<2x8x32xf32>
    %cst = arith.constant 0.176776692 : f32
    %2 = vector.broadcast %cst : f32 to vector<2x8x32xf32>
    %3 = arith.mulf %1, %2 : vector<2x8x32xf32>
    %c0_3 = arith.constant 0 : index
    %c0_4 = arith.constant 0 : index
    %c0_5 = arith.constant 0 : index
    %c0_6 = arith.constant 0 : index
    %4 = vector.load %arg4[%c0_3, %c0_4, %c0_5, %c0_6] : memref<1x2x8x32xf32, #tpu.memory_space<vmem>>, vector<1x2x8x32xf32>
    %5 = vector.shape_cast %4 : vector<1x2x8x32xf32> to vector<2x8x32xf32>
    %c0_7 = arith.constant 0 : index
    %c0_8 = arith.constant 0 : index
    %c0_9 = arith.constant 0 : index
    %c0_10 = arith.constant 0 : index
    %6 = vector.load %arg5[%c0_7, %c0_8, %c0_9, %c0_10] : memref<1x2x8x32xf32, #tpu.memory_space<vmem>>, vector<1x2x8x32xf32>
    %7 = vector.shape_cast %6 : vector<1x2x8x32xf32> to vector<2x8x32xf32>
    %cst_11 = arith.constant dense<0.000000e+00> : vector<2x8x8xf32>
    %8 = tpu.matmul %3, %5, %cst_11 {dimension_numbers = #tpu.dot_dimension_numbers<[2], [2], [1], [1], [0, 0, 0, 1, 1, 1], [0], [0]>} : vector<2x8x32xf32>, vector<2x8x32xf32>, vector<2x8x8xf32> -> vector<2x8x8xf32>
    %c0_12 = arith.constant 0 : index
    %c0_13 = arith.constant 0 : index
    %c0_14 = arith.constant 0 : index
    %9 = vector.load %arg6[%c0_12, %c0_13, %c0_14] : memref<1x8x8xf32, #tpu.memory_space<vmem>>, vector<1x8x8xf32>
    %10 = vector.shape_cast %9 : vector<1x8x8xf32> to vector<8x8xf32>
    %cst_15 = arith.constant 0.000000e+00 : f32
    %11 = vector.broadcast %cst_15 : f32 to vector<8x8xf32>
    %12 = arith.cmpf one, %10, %11 : vector<8x8xf32>
    %13 = vector.shape_cast %12 : vector<8x8xi1> to vector<1x8x8xi1>
    %cst_16 = arith.constant -1.000000e+09 : f32
    %14 = vector.shape_cast %13 : vector<1x8x8xi1> to vector<1x8x8xi1>
    %15 = vector.broadcast %14 : vector<1x8x8xi1> to vector<2x8x8xi1>
    %16 = vector.broadcast %cst_16 : f32 to vector<2x8x8xf32>
    %17 = arith.select %15, %8, %16 : vector<2x8x8xi1>, vector<2x8x8xf32>
    %cst_17 = arith.constant dense<0xFF800000> : vector<2x8xf32>
    %18 = vector.multi_reduction <maximumf>, %17, %cst_17 [2] : vector<2x8x8xf32> to vector<2x8xf32>
    %19 = vector.shape_cast %18 : vector<2x8xf32> to vector<2x8x1xf32>
    %20 = vector.broadcast %19 : vector<2x8x1xf32> to vector<2x8x8xf32>
    %21 = arith.subf %17, %20 : vector<2x8x8xf32>
    %22 = math.exp %21 : vector<2x8x8xf32>
    %cst_18 = arith.constant dense<0.000000e+00> : vector<2x8xf32>
    %23 = vector.multi_reduction <add>, %22, %cst_18 [2] : vector<2x8x8xf32> to vector<2x8xf32>
    %24 = vector.shape_cast %23 : vector<2x8xf32> to vector<2x8x1xf32>
    %cst_19 = arith.constant 1.000000e+00 : f32
    %25 = vector.broadcast %cst_19 : f32 to vector<2x8x1xf32>
    %26 = arith.divf %25, %24 : vector<2x8x1xf32>
    %27 = vector.broadcast %26 : vector<2x8x1xf32> to vector<2x8x8xf32>
    %28 = arith.mulf %22, %27 : vector<2x8x8xf32>
    %cst_20 = arith.constant dense<0.000000e+00> : vector<2x8x32xf32>
    %29 = tpu.matmul %28, %7, %cst_20 {dimension_numbers = #tpu.dot_dimension_numbers<[2], [1], [1], [2], [0, 0, 0, 1, 1, 2], [0], [0]>} : vector<2x8x8xf32>, vector<2x8x32xf32>, vector<2x8x32xf32> -> vector<2x8x32xf32>
    %c0_21 = arith.constant 0 : index
    %c0_22 = arith.constant 0 : index
    %c0_23 = arith.constant 0 : index
    %c0_24 = arith.constant 0 : index
    %30 = vector.load %arg7[%c0_21, %c0_22, %c0_23, %c0_24] : memref<1x2x8x32xf32, #tpu.memory_space<vmem>>, vector<1x2x8x32xf32>
    %31 = vector.shape_cast %30 : vector<1x2x8x32xf32> to vector<2x8x32xf32>
    %32 = vector.shape_cast %29 : vector<2x8x32xf32> to vector<1x2x8x32xf32>
    tpu.vector_store %arg7[%c0_21, %c0_22, %c0_23, %c0_24], %32 {strides = array<i32>} : memref<1x2x8x32xf32, #tpu.memory_space<vmem>>, vector<1x2x8x32xf32>,
    %c0_25 = arith.constant 0 : index
    %c0_26 = arith.constant 0 : index
    %c0_27 = arith.constant 0 : index
    %c0_28 = arith.constant 0 : index
    %33 = vector.load %arg8[%c0_25, %c0_26, %c0_27, %c0_28] : memref<1x2x8x8xf32, #tpu.memory_space<vmem>>, vector<1x2x8x8xf32>
    %34 = vector.shape_cast %33 : vector<1x2x8x8xf32> to vector<2x8x8xf32>
    %35 = vector.shape_cast %28 : vector<2x8x8xf32> to vector<1x2x8x8xf32>
    tpu.vector_store %arg8[%c0_25, %c0_26, %c0_27, %c0_28], %35 {strides = array<i32>} : memref<1x2x8x8xf32, #tpu.memory_space<vmem>>, vector<1x2x8x8xf32>,
    return
  }
  func.func @transform_0(%arg0: i32, %arg1: i32, %arg2: i32) -> (i32, i32, i32, i32) {
    %c0_i32 = arith.constant 0 : i32
    %c0_i32_0 = arith.constant 0 : i32
    return %arg0, %arg1, %arg2, %c0_i32 : i32, i32, i32, i32
  }
  func.func @transform_1(%arg0: i32, %arg1: i32, %arg2: i32) -> (i32, i32, i32, i32) {
    %c0_i32 = arith.constant 0 : i32
    %c0_i32_0 = arith.constant 0 : i32
    %c0_i32_1 = arith.constant 0 : i32
    return %arg0, %arg1, %c0_i32, %c0_i32_0 : i32, i32, i32, i32
  }
  func.func @transform_2(%arg0: i32, %arg1: i32, %arg2: i32) -> (i32, i32, i32, i32) {
    %c0_i32 = arith.constant 0 : i32
    %c0_i32_0 = arith.constant 0 : i32
    %c0_i32_1 = arith.constant 0 : i32
    return %arg0, %arg1, %c0_i32, %c0_i32_0 : i32, i32, i32, i32
  }
  func.func @transform_3(%arg0: i32, %arg1: i32, %arg2: i32) -> (i32, i32, i32) {
    %c0_i32 = arith.constant 0 : i32
    %c0_i32_0 = arith.constant 0 : i32
    return %arg0, %arg2, %c0_i32 : i32, i32, i32
  }
  func.func @transform_4(%arg0: i32, %arg1: i32, %arg2: i32) -> (i32, i32, i32, i32) {
    %c0_i32 = arith.constant 0 : i32
    %c0_i32_0 = arith.constant 0 : i32
    return %arg0, %arg1, %arg2, %c0_i32 : i32, i32, i32, i32
  }
  func.func @transform_5(%arg0: i32, %arg1: i32, %arg2: i32) -> (i32, i32, i32, i32) {
    %c0_i32 = arith.constant 0 : i32
    %c0_i32_0 = arith.constant 0 : i32
    return %arg0, %arg1, %arg2, %c0_i32 : i32, i32, i32, i32
  }
}

module attributes {stable_mosaic.version = 11 : i64} {
  func.func @_sdpa_kernel(%arg0: i32, %arg1: i32, %arg2: i32, %arg3: memref<1x2x8x32xf32, #tpu.memory_space<vmem>>, %arg4: memref<1x2x8x32xf32, #tpu.memory_space<vmem>>, %arg5: memref<1x2x8x32xf32, #tpu.memory_space<vmem>>, %arg6: memref<1x8x8xf32, #tpu.memory_space<vmem>>, %arg7: memref<1x2x8x32xf32, #tpu.memory_space<vmem>>, %arg8: memref<1x2x8x8xf32, #tpu.memory_space<vmem>>) attributes {dimension_semantics = [#tpu.dimension_semantics<parallel>, #tpu.dimension_semantics<parallel>, #tpu.dimension_semantics<parallel>], iteration_bounds = array<i64: 2, 1, 1>, scalar_prefetch = 0 : i64, scratch_operands = 0 : i64, tpu.core_type = #tpu.core_type<tc>, window_params = [{transform_indices = @transform_0, window_bounds = array<i64: 1, 2, 8, 32>}, {transform_indices = @transform_1, window_bounds = array<i64: 1, 2, 8, 32>}, {transform_indices = @transform_2, window_bounds = array<i64: 1, 2, 8, 32>}, {transform_indices = @transform_3, window_bounds = array<i64: 1, 8, 8>}, {transform_indices = @transform_4, window_bounds = array<i64: 1, 2, 8, 32>}, {transform_indices = @transform_5, window_bounds = array<i64: 1, 2, 8, 8>}]} {
    %c0 = arith.constant 0 : index
    %c0_0 = arith.constant 0 : index
    %c0_1 = arith.constant 0 : index
    %c0_2 = arith.constant 0 : index
    %0 = vector.load %arg3[%c0, %c0_0, %c0_1, %c0_2] : memref<1x2x8x32xf32, #tpu.memory_space<vmem>>, vector<1x2x8x32xf32>
    %1 = vector.shape_cast %0 : vector<1x2x8x32xf32> to vector<2x8x32xf32>
    %cst = arith.constant 0.176776692 : f32
    %2 = vector.broadcast %cst : f32 to vector<2x8x32xf32>
    %3 = arith.mulf %1, %2 : vector<2x8x32xf32>
    %c0_3 = arith.constant 0 : index
    %c0_4 = arith.constant 0 : index
    %c0_5 = arith.constant 0 : index
    %c0_6 = arith.constant 0 : index
    %4 = vector.load %arg4[%c0_3, %c0_4, %c0_5, %c0_6] : memref<1x2x8x32xf32, #tpu.memory_space<vmem>>, vector<1x2x8x32xf32>
    %5 = vector.shape_cast %4 : vector<1x2x8x32xf32> to vector<2x8x32xf32>
    %c0_7 = arith.constant 0 : index
    %c0_8 = arith.constant 0 : index
    %c0_9 = arith.constant 0 : index
    %c0_10 = arith.constant 0 : index
    %6 = vector.load %arg5[%c0_7, %c0_8, %c0_9, %c0_10] : memref<1x2x8x32xf32, #tpu.memory_space<vmem>>, vector<1x2x8x32xf32>
    %7 = vector.shape_cast %6 : vector<1x2x8x32xf32> to vector<2x8x32xf32>
    %cst_11 = arith.constant dense<0.000000e+00> : vector<2x8x8xf32>
    %8 = tpu.matmul %3, %5, %cst_11 {dimension_numbers = #tpu.dot_dimension_numbers<[2], [2], [1], [1], [0, 0, 0, 1, 1, 1], [0], [0]>} : vector<2x8x32xf32>, vector<2x8x32xf32>, vector<2x8x8xf32> -> vector<2x8x8xf32>
    %c0_12 = arith.constant 0 : index
    %c0_13 = arith.constant 0 : index
    %c0_14 = arith.constant 0 : index
    %9 = vector.load %arg6[%c0_12, %c0_13, %c0_14] : memref<1x8x8xf32, #tpu.memory_space<vmem>>, vector<1x8x8xf32>
    %10 = vector.shape_cast %9 : vector<1x8x8xf32> to vector<8x8xf32>
    %cst_15 = arith.constant 0.000000e+00 : f32
    %11 = vector.broadcast %cst_15 : f32 to vector<8x8xf32>
    %12 = arith.cmpf one, %10, %11 : vector<8x8xf32>
    %13 = vector.shape_cast %12 : vector<8x8xi1> to vector<1x8x8xi1>
    %cst_16 = arith.constant -1.000000e+09 : f32
    %14 = vector.shape_cast %13 : vector<1x8x8xi1> to vector<1x8x8xi1>
    %15 = vector.broadcast %14 : vector<1x8x8xi1> to vector<2x8x8xi1>
    %16 = vector.broadcast %cst_16 : f32 to vector<2x8x8xf32>
    %17 = arith.select %15, %8, %16 : vector<2x8x8xi1>, vector<2x8x8xf32>
    %cst_17 = arith.constant dense<0xFF800000> : vector<2x8xf32>
    %18 = vector.multi_reduction <maximumf>, %17, %cst_17 [2] : vector<2x8x8xf32> to vector<2x8xf32>
    %19 = vector.shape_cast %18 : vector<2x8xf32> to vector<2x8x1xf32>
    %20 = vector.broadcast %19 : vector<2x8x1xf32> to vector<2x8x8xf32>
    %21 = arith.subf %17, %20 : vector<2x8x8xf32>
    %22 = math.exp %21 : vector<2x8x8xf32>
    %cst_18 = arith.constant dense<0.000000e+00> : vector<2x8xf32>
    %23 = vector.multi_reduction <add>, %22, %cst_18 [2] : vector<2x8x8xf32> to vector<2x8xf32>
    %24 = vector.shape_cast %23 : vector<2x8xf32> to vector<2x8x1xf32>
    %cst_19 = arith.constant 1.000000e+00 : f32
    %25 = vector.broadcast %cst_19 : f32 to vector<2x8x1xf32>
    %26 = arith.divf %25, %24 : vector<2x8x1xf32>
    %27 = vector.broadcast %26 : vector<2x8x1xf32> to vector<2x8x8xf32>
    %28 = arith.mulf %22, %27 : vector<2x8x8xf32>
    %cst_20 = arith.constant dense<0.000000e+00> : vector<2x8x32xf32>
    %29 = tpu.matmul %28, %7, %cst_20 {dimension_numbers = #tpu.dot_dimension_numbers<[2], [1], [1], [2], [0, 0, 0, 1, 1, 2], [0], [0]>} : vector<2x8x8xf32>, vector<2x8x32xf32>, vector<2x8x32xf32> -> vector<2x8x32xf32>
    %c0_21 = arith.constant 0 : index
    %c0_22 = arith.constant 0 : index
    %c0_23 = arith.constant 0 : index
    %c0_24 = arith.constant 0 : index
    %30 = vector.load %arg7[%c0_21, %c0_22, %c0_23, %c0_24] : memref<1x2x8x32xf32, #tpu.memory_space<vmem>>, vector<1x2x8x32xf32>
    %31 = vector.shape_cast %30 : vector<1x2x8x32xf32> to vector<2x8x32xf32>
    %32 = vector.shape_cast %29 : vector<2x8x32xf32> to vector<1x2x8x32xf32>
    tpu.vector_store %arg7[%c0_21, %c0_22, %c0_23, %c0_24], %32 {strides = array<i32>} : memref<1x2x8x32xf32, #tpu.memory_space<vmem>>, vector<1x2x8x32xf32>,
    %c0_25 = arith.constant 0 : index
    %c0_26 = arith.constant 0 : index
    %c0_27 = arith.constant 0 : index
    %c0_28 = arith.constant 0 : index
    %33 = vector.load %arg8[%c0_25, %c0_26, %c0_27, %c0_28] : memref<1x2x8x8xf32, #tpu.memory_space<vmem>>, vector<1x2x8x8xf32>
    %34 = vector.shape_cast %33 : vector<1x2x8x8xf32> to vector<2x8x8xf32>
    %35 = vector.shape_cast %28 : vector<2x8x8xf32> to vector<1x2x8x8xf32>
    tpu.vector_store %arg8[%c0_25, %c0_26, %c0_27, %c0_28], %35 {strides = array<i32>} : memref<1x2x8x8xf32, #tpu.memory_space<vmem>>, vector<1x2x8x8xf32>,
    return
  }
  func.func @transform_0(%arg0: i32, %arg1: i32, %arg2: i32) -> (i32, i32, i32, i32) {
    %c0_i32 = arith.constant 0 : i32
    %c0_i32_0 = arith.constant 0 : i32
    return %arg0, %arg1, %arg2, %c0_i32 : i32, i32, i32, i32
  }
  func.func @transform_1(%arg0: i32, %arg1: i32, %arg2: i32) -> (i32, i32, i32, i32) {
    %c0_i32 = arith.constant 0 : i32
    %c0_i32_0 = arith.constant 0 : i32
    %c0_i32_1 = arith.constant 0 : i32
    return %arg0, %arg1, %c0_i32, %c0_i32_0 : i32, i32, i32, i32
  }
  func.func @transform_2(%arg0: i32, %arg1: i32, %arg2: i32) -> (i32, i32, i32, i32) {
    %c0_i32 = arith.constant 0 : i32
    %c0_i32_0 = arith.constant 0 : i32
    %c0_i32_1 = arith.constant 0 : i32
    return %arg0, %arg1, %c0_i32, %c0_i32_0 : i32, i32, i32, i32
  }
  func.func @transform_3(%arg0: i32, %arg1: i32, %arg2: i32) -> (i32, i32, i32) {
    %c0_i32 = arith.constant 0 : i32
    %c0_i32_0 = arith.constant 0 : i32
    return %arg0, %arg2, %c0_i32 : i32, i32, i32
  }
  func.func @transform_4(%arg0: i32, %arg1: i32, %arg2: i32) -> (i32, i32, i32, i32) {
    %c0_i32 = arith.constant 0 : i32
    %c0_i32_0 = arith.constant 0 : i32
    return %arg0, %arg1, %arg2, %c0_i32 : i32, i32, i32, i32
  }
  func.func @transform_5(%arg0: i32, %arg1: i32, %arg2: i32) -> (i32, i32, i32, i32) {
    %c0_i32 = arith.constant 0 : i32
    %c0_i32_0 = arith.constant 0 : i32
    return %arg0, %arg1, %arg2, %c0_i32 : i32, i32, i32, i32
  }
}

</mosaic_0001>

<llo_original>
// kernel: tpu_custom_call.1
$region0: #{tpu_custom_call.1}
  #allocation0 [shape = 'u32[]', space=smem, size = 0x4, offset = 0x4, fixed_abs, tag = 'smem constant byte address 0x4 - core index']
  #allocation1 [shape = 'u32[144,128]{1,0:T(1,128)}', space=vmem, size = 0x12000, scoped, tag = 'internal scratch']
  %s0 = inlined_call_operand.hbm [shape: f32[2,2,8,32], index: 0, kind: input, shape index: {}]
  %s1 = inlined_call_operand.hbm [shape: f32[2,2,8,32], index: 1, kind: input, shape index: {}]
  %s2 = inlined_call_operand.hbm [shape: f32[2,2,8,32], index: 2, kind: input, shape index: {}]
  %s3 = inlined_call_operand.hbm [shape: f32[2,8,8], index: 3, kind: input, shape index: {}]
  %s4 = inlined_call_operand.hbm [shape: f32[2,2,8,32], index: 4, kind: output, shape index: {0}]
  %s5 = inlined_call_operand.hbm [shape: f32[2,2,8,8], index: 5, kind: output, shape index: {1}]
  %6 = xla_tuple %s4, %s5
  %s7 = sld [smem:[#allocation0]]
  $region73: #{tpu_custom_call.1} parent=0
    _
  %s9 = ssub.s32 1, %s7
  %s10 = scalar_select 0, %s9, %s7
  $region1: #{tpu_custom_call.1} parent=0
    #allocation2 [shape = 'u8[16384]{0}', space=vmem, size = 0x4000, scoped, tag = 'input window, operand 0']
    #allocation3 [shape = 's32[2]{0}', space=sflag, size = 0x8, scoped, tag = 'scoped memory for tpu_custom_call.1']
    #allocation4 [shape = 's32[2]{0}', space=sflag, size = 0x8, scoped, tag = 'scoped memory for tpu_custom_call.1']
    #allocation5 [shape = 'u8[8192]{0}', space=vmem, size = 0x2000, scoped, tag = 'input window, operand 1, single buffered']
    #allocation6 [shape = 's32[1]{0}', space=sflag, size = 0x4, scoped, tag = 'scoped memory for tpu_custom_call.1']
    #allocation7 [shape = 'u8[8192]{0}', space=vmem, size = 0x2000, scoped, tag = 'input window, operand 2, single buffered']
    #allocation8 [shape = 'u8[8192]{0}', space=vmem, size = 0x2000, scoped, tag = 'input window, operand 3']
    #allocation9 [shape = 's32[2]{0}', space=sflag, size = 0x8, scoped, tag = 'scoped memory for tpu_custom_call.1']
    #allocation10 [shape = 'u8[16384]{0}', space=vmem, size = 0x4000, scoped, tag = 'output window, operand 0']
    #allocation11 [shape = 'u8[16384]{0}', space=vmem, size = 0x4000, scoped, tag = 'output window, operand 1']
    #allocation12 [shape = 's32[2]{0}', space=sflag, size = 0x8, scoped, tag = 'scoped memory for tpu_custom_call.1']
    %11 = vsyncpa [#allocation3], 0
    %s12 = scalar_lea.sflag [#allocation3], 1
    %13 = vsyncpa %s12, 0
    %14 = vsyncpa [#allocation6], 0
    %15 = vsyncpa [#allocation9], 0
    %s16 = scalar_lea.sflag [#allocation9], 1
    %17 = vsyncpa %s16, 0
    %18 = vsyncpa [#allocation4], 0
    %s19 = scalar_lea.sflag [#allocation4], 1
    %20 = vsyncpa %s19, 0
    %21 = vsyncpa [#allocation12], 0
    %s22 = scalar_lea.sflag [#allocation12], 1
    %23 = vsyncpa %s22, 0
    loop: start=0, step=1, limit=4
    $region2: #{tpu_custom_call.1} parent=1 // loop_pre_header
      _
    $region3: #{tpu_custom_call.1} parent=1 // loop_header
      %s25 = sphi 0, %s29
      %p26 = scmp.ge.s32.totalorder %s25, 4
      %s32 = sphi 0, %s51
      %s33 = sphi 0, %s47
      %s34 = sphi 0, %s43
      %s35 = sphi 0, %s32
      %s36 = sphi 0, %s33
      %s37 = sphi 0, %s34
      %s38 = sphi 0, %s35
      %s39 = sphi 0, %s36
      %s40 = sphi 0, %s37
      %s58 = sphi 0, %s60
      %s61 = sphi 0, %s58
      %s62 = sphi 0, %s61
      %s78 = sphi 0, %s62
      %s86 = sphi 0, %s88
      %s89 = sphi 0, %s86
      %s90 = sphi 0, %s89
      %s106 = sphi 0, %s90
      %s114 = sphi 0, %s116
      %s117 = sphi 0, %s114
      %s118 = sphi 0, %s117
      %s134 = sphi 0, %s118
      %s142 = sphi 0, %s144
      %s145 = sphi 0, %s142
      %s146 = sphi 0, %s145
      %s162 = sphi 0, %s146
      %s172 = sphi 0, %s174
      %s175 = sphi 0, %s172
      %s176 = sphi 0, %s175
      %s192 = sphi 0, %s176
      %s202 = sphi 0, %s204
      %s205 = sphi 0, %s202
      %s206 = sphi 0, %s205
      %s222 = sphi 0, %s206
    $region4: #{tpu_custom_call.1} parent=1 // loop_header_branch
      %28 = sbr.rel (%p26) target = $region8
    $region5: #{tpu_custom_call.1} parent=1 // loop_body
      %s30 = ssub.s32 %s25, 1
      %s31 = ssub.s32 %s25, 2
      %s41 = sadd.s32 1, %s34
      %p42 = scmp.ge.s32.totalorder %s41, 1
      %s43 = scalar_select %p42, 0, %s41
      %s44 = sadd.s32 1, %s33
      %s45 = scalar_select %p42, %s44, %s33
      %p46 = scmp.ge.s32.totalorder %s45, 1
      %s47 = scalar_select %p46, 0, %s45
      %s48 = sadd.s32 1, %s32
      %s49 = scalar_select %p46, %s48, %s32
      %p50 = scmp.ge.s32.totalorder %s49, 2
      %s51 = scalar_select %p50, 0, %s49
      %s52 = ssub.s32 %s32, %s51
      %s53 = ssub.s32 %s33, %s47
      %s54 = sor.u32 %s52, %s53
      %s55 = ssub.s32 %s34, %s43
      %s56 = sor.u32 %s54, %s55
      %p57 = scmp.eq.s32.totalorder %s56, 0
      %s59 = sadd.s32 %s58, 1
      %s60 = scalar_select %p57, %s58, %s59
      %p63 = pneg %p57
      %p64 = scmp.eq.s32.totalorder %s25, 1
      %p65 = por %p63, %p64
      %p66 = scmp.ne.s32.totalorder %s58, %s61
      %p67 = scmp.eq.s32.totalorder %s25, 0
      %p68 = por %p66, %p67
      %p69 = scmp.ne.s32.totalorder %s58, %s61
      %p70 = scmp.eq.s32.totalorder %s30, 1
      %p71 = por %p69, %p70
      %p72 = scmp.ne.s32.totalorder %s61, %s62
      %p73 = scmp.eq.s32.totalorder %s30, 0
      %p74 = por %p72, %p73
      %p75 = scmp.ne.s32.totalorder %s61, %s62
      %p76 = scmp.eq.s32.totalorder %s31, 1
      %p77 = por %p75, %p76
      %p79 = scmp.ne.s32.totalorder %s62, %s78
      %p80 = scmp.eq.s32.totalorder %s31, 0
      %p81 = por %p79, %p80
      %s82 = ssub.s32 %s32, %s51
      %s83 = ssub.s32 %s33, %s47
      %s84 = sor.u32 %s82, %s83
      %p85 = scmp.eq.s32.totalorder %s84, 0
      %s87 = sadd.s32 %s86, 1
      %s88 = scalar_select %p85, %s86, %s87
      %p91 = pneg %p85
      %p92 = scmp.eq.s32.totalorder %s25, 1
      %p93 = por %p91, %p92
      %p94 = scmp.ne.s32.totalorder %s86, %s89
      %p95 = scmp.eq.s32.totalorder %s25, 0
      %p96 = por %p94, %p95
      %p97 = scmp.ne.s32.totalorder %s86, %s89
      %p98 = scmp.eq.s32.totalorder %s30, 1
      %p99 = por %p97, %p98
      %p100 = scmp.ne.s32.totalorder %s89, %s90
      %p101 = scmp.eq.s32.totalorder %s30, 0
      %p102 = por %p100, %p101
      %p103 = scmp.ne.s32.totalorder %s89, %s90
      %p104 = scmp.eq.s32.totalorder %s31, 1
      %p105 = por %p103, %p104
      %p107 = scmp.ne.s32.totalorder %s90, %s106
      %p108 = scmp.eq.s32.totalorder %s31, 0
      %p109 = por %p107, %p108
      %s110 = ssub.s32 %s32, %s51
      %s111 = ssub.s32 %s33, %s47
      %s112 = sor.u32 %s110, %s111
      %p113 = scmp.eq.s32.totalorder %s112, 0
      %s115 = sadd.s32 %s114, 1
      %s116 = scalar_select %p113, %s114, %s115
      %p119 = pneg %p113
      %p120 = scmp.eq.s32.totalorder %s25, 1
      %p121 = por %p119, %p120
      %p122 = scmp.ne.s32.totalorder %s114, %s117
      %p123 = scmp.eq.s32.totalorder %s25, 0
      %p124 = por %p122, %p123
      %p125 = scmp.ne.s32.totalorder %s114, %s117
      %p126 = scmp.eq.s32.totalorder %s30, 1
      %p127 = por %p125, %p126
      %p128 = scmp.ne.s32.totalorder %s117, %s118
      %p129 = scmp.eq.s32.totalorder %s30, 0
      %p130 = por %p128, %p129
      %p131 = scmp.ne.s32.totalorder %s117, %s118
      %p132 = scmp.eq.s32.totalorder %s31, 1
      %p133 = por %p131, %p132
      %p135 = scmp.ne.s32.totalorder %s118, %s134
      %p136 = scmp.eq.s32.totalorder %s31, 0
      %p137 = por %p135, %p136
      %s138 = ssub.s32 %s32, %s51
      %s139 = ssub.s32 %s34, %s43
      %s140 = sor.u32 %s138, %s139
      %p141 = scmp.eq.s32.totalorder %s140, 0
      %s143 = sadd.s32 %s142, 1
      %s144 = scalar_select %p141, %s142, %s143
      %p147 = pneg %p141
      %p148 = scmp.eq.s32.totalorder %s25, 1
      %p149 = por %p147, %p148
      %p150 = scmp.ne.s32.totalorder %s142, %s145
      %p151 = scmp.eq.s32.totalorder %s25, 0
      %p152 = por %p150, %p151
      %p153 = scmp.ne.s32.totalorder %s142, %s145
      %p154 = scmp.eq.s32.totalorder %s30, 1
      %p155 = por %p153, %p154
      %p156 = scmp.ne.s32.totalorder %s145, %s146
      %p157 = scmp.eq.s32.totalorder %s30, 0
      %p158 = por %p156, %p157
      %p159 = scmp.ne.s32.totalorder %s145, %s146
      %p160 = scmp.eq.s32.totalorder %s31, 1
      %p161 = por %p159, %p160
      %p163 = scmp.ne.s32.totalorder %s146, %s162
      %p164 = scmp.eq.s32.totalorder %s31, 0
      %p165 = por %p163, %p164
      %s166 = ssub.s32 %s32, %s51
      %s167 = ssub.s32 %s33, %s47
      %s168 = sor.u32 %s166, %s167
      %s169 = ssub.s32 %s34, %s43
      %s170 = sor.u32 %s168, %s169
      %p171 = scmp.eq.s32.totalorder %s170, 0
      %s173 = sadd.s32 %s172, 1
      %s174 = scalar_select %p171, %s172, %s173
      %p177 = pneg %p171
      %p178 = scmp.eq.s32.totalorder %s25, 1
      %p179 = por %p177, %p178
      %p180 = scmp.ne.s32.totalorder %s172, %s175
      %p181 = scmp.eq.s32.totalorder %s25, 0
      %p182 = por %p180, %p181
      %p183 = scmp.ne.s32.totalorder %s172, %s175
      %p184 = scmp.eq.s32.totalorder %s30, 1
      %p185 = por %p183, %p184
      %p186 = scmp.ne.s32.totalorder %s175, %s176
      %p187 = scmp.eq.s32.totalorder %s30, 0
      %p188 = por %p186, %p187
      %p189 = scmp.ne.s32.totalorder %s175, %s176
      %p190 = scmp.eq.s32.totalorder %s31, 1
      %p191 = por %p189, %p190
      %p193 = scmp.ne.s32.totalorder %s176, %s192
      %p194 = scmp.eq.s32.totalorder %s31, 0
      %p195 = por %p193, %p194
      %s196 = ssub.s32 %s32, %s51
      %s197 = ssub.s32 %s33, %s47
      %s198 = sor.u32 %s196, %s197
      %s199 = ssub.s32 %s34, %s43
      %s200 = sor.u32 %s198, %s199
      %p201 = scmp.eq.s32.totalorder %s200, 0
      %s203 = sadd.s32 %s202, 1
      %s204 = scalar_select %p201, %s202, %s203
      %p207 = pneg %p201
      %p208 = scmp.eq.s32.totalorder %s25, 1
      %p209 = por %p207, %p208
      %p210 = scmp.ne.s32.totalorder %s202, %s205
      %p211 = scmp.eq.s32.totalorder %s25, 0
      %p212 = por %p210, %p211
      %p213 = scmp.ne.s32.totalorder %s202, %s205
      %p214 = scmp.eq.s32.totalorder %s30, 1
      %p215 = por %p213, %p214
      %p216 = scmp.ne.s32.totalorder %s205, %s206
      %p217 = scmp.eq.s32.totalorder %s30, 0
      %p218 = por %p216, %p217
      %p219 = scmp.ne.s32.totalorder %s205, %s206
      %p220 = scmp.eq.s32.totalorder %s31, 1
      %p221 = por %p219, %p220
      %p223 = scmp.ne.s32.totalorder %s206, %s222
      %p224 = scmp.eq.s32.totalorder %s31, 0
      %p225 = por %p223, %p224
      %p226 = scmp.le.s32.totalorder 1, %s25
      %p227 = scmp.lt.s32.totalorder %s25, 3
      %p228 = pnand %p226, %p227
      %p229 = pneg %p228
      // Predicated region
      $region9: #{tpu_custom_call.1} parent=5 // pred_check
        _
      $region10: #{tpu_custom_call.1} parent=5 // pred_check_branch
        %231 = sbr.rel (%p228) target = $region12
      $region11: #{tpu_custom_call.1} parent=5 // pred_region
        %s232 = ssub.s32 %s25, 1
        // Predicated region
        $region13: #{tpu_custom_call.1} parent=11 // pred_check
          %p233 = pneg %p102
        $region14: #{tpu_custom_call.1} parent=11 // pred_check_branch
          %235 = sbr.rel (%p233) target = $region16
        $region15: #{tpu_custom_call.1} parent=11 // pred_region
          %s236 = smul.u32 2, %s36
          %s238 = ssub.s32 256, 256
          %239 = vsyncadd [#allocation6], %s238
          %s240 = smul.addr %s35, 2
          %s241 = sadd.s32 %s236, %s240
          %s242 = smul.addr %s241, 128
          %s243 = scalar_lea.hbm %s1, %s242
          %s244 = sshll.u32 [#allocation5], 4
          %s245 = int_to_ptr.vmem [resolvable:$true] %s244
          %250 = dma.hbm_to_vmem [thread:$0]  %s243, 256, %s245, [#allocation6], 128, 128, 8
        $region16: #{tpu_custom_call.1} parent=11 // pred_fallthru
          _
        // Predicated region
        $region17: #{tpu_custom_call.1} parent=11 // pred_check
          %p251 = pneg %p130
        $region18: #{tpu_custom_call.1} parent=11 // pred_check_branch
          %253 = sbr.rel (%p251) target = $region20
        $region19: #{tpu_custom_call.1} parent=11 // pred_region
          %s254 = smul.u32 2, %s36
          %s256 = ssub.s32 256, 256
          %257 = vsyncadd [#allocation6], %s256
          %s258 = smul.addr %s35, 2
          %s259 = sadd.s32 %s254, %s258
          %s260 = smul.addr %s259, 128
          %s261 = scalar_lea.hbm %s2, %s260
          %s262 = sshll.u32 [#allocation7], 4
          %s263 = int_to_ptr.vmem [resolvable:$true] %s262
          %268 = dma.hbm_to_vmem [thread:$0]  %s261, 256, %s263, [#allocation6], 128, 128, 8
        $region20: #{tpu_custom_call.1} parent=11 // pred_fallthru
          _
      $region12: #{tpu_custom_call.1} parent=5 // pred_fallthru
        _
      %p269 = scmp.lt.s32.totalorder %s25, 2
      // Predicated region
      $region21: #{tpu_custom_call.1} parent=5 // pred_check
        %p270 = pneg %p269
      $region22: #{tpu_custom_call.1} parent=5 // pred_check_branch
        %272 = sbr.rel (%p270) target = $region24
      $region23: #{tpu_custom_call.1} parent=5 // pred_region
        // Predicated region
        $region25: #{tpu_custom_call.1} parent=23 // pred_check
          %p273 = pneg %p68
        $region26: #{tpu_custom_call.1} parent=23 // pred_check_branch
          %275 = sbr.rel (%p273) target = $region28
        $region27: #{tpu_custom_call.1} parent=23 // pred_region
          %s276 = sand.u32 %s58, 1
          %s277 = scalar_lea.sflag [#allocation3], %s276
          %s278 = sand.u32 %s58, 1
          %s279 = smul.addr %s278, 16
          %s280 = scalar_lea.vmem [#allocation2], %s279
          %s281 = smul.u32 2, %s33
          %s283 = ssub.s32 256, 256
          %284 = vsyncadd %s277, %s283
          %s285 = sadd.s32 %s34, %s281
          %s286 = smul.addr %s32, 2
          %s287 = sadd.s32 %s285, %s286
          %s288 = smul.addr %s287, 128
          %s289 = scalar_lea.hbm %s0, %s288
          %s290 = sshll.u32 %s280, 4
          %s291 = int_to_ptr.vmem [resolvable:$true] %s290
          %296 = dma.hbm_to_vmem [thread:$0]  %s289, 256, %s291, %s277, 128, 128, 8
        $region28: #{tpu_custom_call.1} parent=23 // pred_fallthru
          _
        // Predicated region
        $region29: #{tpu_custom_call.1} parent=23 // pred_check
          %p297 = pneg %p152
        $region30: #{tpu_custom_call.1} parent=23 // pred_check_branch
          %299 = sbr.rel (%p297) target = $region32
        $region31: #{tpu_custom_call.1} parent=23 // pred_region
          %s300 = sand.u32 %s142, 1
          %s301 = scalar_lea.sflag [#allocation9], %s300
          %s302 = sand.u32 %s142, 1
          %s303 = smul.addr %s302, 8
          %s304 = scalar_lea.vmem [#allocation8], %s303
          %s306 = ssub.s32 128, 128
          %307 = vsyncadd %s301, %s306
          %s308 = sadd.s32 %s34, %s32
          %s309 = smul.addr %s308, 128
          %s310 = scalar_lea.hbm %s3, %s309
          %s312 = sshll.u32 %s304, 4
          %s313 = int_to_ptr.vmem [resolvable:$true] %s312
          %315 = dma.hbm_to_vmem [thread:$0]  %s310, 128, %s313, %s301
        $region32: #{tpu_custom_call.1} parent=23 // pred_fallthru
          _
      $region24: #{tpu_custom_call.1} parent=5 // pred_fallthru
        _
      %p316 = scmp.le.s32.totalorder 1, %s25
      %p317 = scmp.lt.s32.totalorder %s25, 3
      %p318 = pnand %p316, %p317
      %p319 = pneg %p318
      // Predicated region
      $region33: #{tpu_custom_call.1} parent=5 // pred_check
        _
      $region34: #{tpu_custom_call.1} parent=5 // pred_check_branch
        %321 = sbr.rel (%p318) target = $region36
      $region35: #{tpu_custom_call.1} parent=5 // pred_region
        %s322 = ssub.s32 %s25, 1
        %s323 = sand.u32 %s61, 1
        %s324 = scalar_lea.sflag [#allocation3], %s323
        %s325 = sand.u32 %s61, 1
        %s326 = smul.addr %s325, 16
        %s327 = scalar_lea.vmem [#allocation2], %s326
        // Predicated region
        $region37: #{tpu_custom_call.1} parent=35 // pred_check
          %p328 = pneg %p74
        $region38: #{tpu_custom_call.1} parent=35 // pred_check_branch
          %330 = sbr.rel (%p328) target = $region40
        $region39: #{tpu_custom_call.1} parent=35 // pred_region
          %331 = dma.done %s324, 256
        $region40: #{tpu_custom_call.1} parent=35 // pred_fallthru
          _
        // Predicated region
        $region41: #{tpu_custom_call.1} parent=35 // pred_check
          %p332 = pneg %p102
        $region42: #{tpu_custom_call.1} parent=35 // pred_check_branch
          %334 = sbr.rel (%p332) target = $region44
        $region43: #{tpu_custom_call.1} parent=35 // pred_region
          %335 = dma.done [#allocation6], 256
        $region44: #{tpu_custom_call.1} parent=35 // pred_fallthru
          _
        // Predicated region
        $region45: #{tpu_custom_call.1} parent=35 // pred_check
          %p336 = pneg %p130
        $region46: #{tpu_custom_call.1} parent=35 // pred_check_branch
          %338 = sbr.rel (%p336) target = $region48
        $region47: #{tpu_custom_call.1} parent=35 // pred_region
          %339 = dma.done [#allocation6], 256
        $region48: #{tpu_custom_call.1} parent=35 // pred_fallthru
          _
        %s340 = sand.u32 %s145, 1
        %s341 = scalar_lea.sflag [#allocation9], %s340
        %s342 = sand.u32 %s145, 1
        %s343 = smul.addr %s342, 8
        %s344 = scalar_lea.vmem [#allocation8], %s343
        // Predicated region
        $region49: #{tpu_custom_call.1} parent=35 // pred_check
          %p345 = pneg %p158
        $region50: #{tpu_custom_call.1} parent=35 // pred_check_branch
          %347 = sbr.rel (%p345) target = $region52
        $region51: #{tpu_custom_call.1} parent=35 // pred_region
          %348 = dma.done %s341, 128
        $region52: #{tpu_custom_call.1} parent=35 // pred_fallthru
          _
        %s349 = sand.u32 %s61, 1
        %s350 = scalar_lea.sflag [#allocation3], %s349
        %s351 = sand.u32 %s61, 1
        %s352 = smul.addr %s351, 16
        %s353 = scalar_lea.vmem [#allocation2], %s352
        %p354 = pneg %p74
        %p355 = pneg %p71
        %p356 = pneg %p102
        %p357 = pneg %p99
        %p358 = pneg %p130
        %p359 = pneg %p127
        %s360 = sand.u32 %s145, 1
        %s361 = scalar_lea.sflag [#allocation9], %s360
        %s362 = sand.u32 %s145, 1
        %s363 = smul.addr %s362, 8
        %s364 = scalar_lea.vmem [#allocation8], %s363
        %p365 = pneg %p158
        %p366 = pneg %p155
        %p367 = pneg %p188
        %p368 = pneg %p185
        %s369 = sand.u32 %s175, 1
        %s370 = scalar_lea.sflag [#allocation4], %s369
        %s371 = sand.u32 %s175, 1
        %s372 = smul.addr %s371, 16
        %s373 = scalar_lea.vmem [#allocation10], %s372
        %p374 = pneg %p218
        %p375 = pneg %p215
        %s376 = sand.u32 %s205, 1
        %s377 = scalar_lea.sflag [#allocation12], %s376
        %s378 = sand.u32 %s205, 1
        %s379 = smul.addr %s378, 16
        %s380 = scalar_lea.vmem [#allocation11], %s379
        %s381 = smul.u32 2, %s36
        %s382 = smul.u32 2, %s36
        %s383 = smul.u32 2, %s36
        %s384 = smul.u32 2, %s36
        %s385 = smul.u32 2, %s36
        %v386 = vld [vmem:[%s327] sm:$0xff]
        %v387 = vld [vmem:[%s327 + $0x8] sm:$0xff]
        %v388 = vmul.f32 %v386, 0.17677669
        %v389 = vmul.f32 %v387, 0.17677669
        %v390 = vld [vmem:[#allocation5] sm:$0xff]
        %v391 = vld [vmem:[#allocation5 + $0x8] sm:$0xff]
        %v392 = vld [vmem:[#allocation7] sm:$0xff]
        %v393 = vld [vmem:[#allocation7 + $0x8] sm:$0xff]
        %vm394 = vcmask 261120
        %v396 = vsel %vm394, %v388, 0
        %v399 = vsel %vm394, %v390, 0
        %401 = vmatprep.subr.mxu0 0.0
        %402 = vmatpush1.xpose.msra.mxu0 %v399
        %403 = vmatprep.subr.mxu0 0.0
        %404 = vmatpush1.xpose.msra.mxu0 0.0
        %405 = vmatprep.subr.mxu0 0.0
        %406 = vmatpush1.xpose.msra.mxu0 0.0
        %407 = vmatprep.subr.mxu0 0.0
        %408 = vmatpush1.xpose.msra.mxu0 0.0
        %409 = vmatprep.subr.mxu0 0.0
        %410 = vmatpush1.xpose.msra.mxu0 0.0
        %411 = vmatprep.subr.mxu0 0.0
        %412 = vmatpush1.xpose.msra.mxu0 0.0
        %413 = vmatprep.subr.mxu0 0.0
        %414 = vmatpush1.xpose.msra.mxu0 0.0
        %415 = vmatprep.subr.mxu0 0.0
        %416 = vmatpush1.xpose.msra.mxu0 0.0
        %417 = vmatprep.subr.mxu0 0.0
        %418 = vmatpush1.xpose.msra.mxu0 0.0
        %419 = vmatprep.subr.mxu0 0.0
        %420 = vmatpush1.xpose.msra.mxu0 0.0
        %421 = vmatprep.subr.mxu0 0.0
        %422 = vmatpush1.xpose.msra.mxu0 0.0
        %423 = vmatprep.subr.mxu0 0.0
        %424 = vmatpush1.xpose.msra.mxu0 0.0
        %425 = vmatprep.subr.mxu0 0.0
        %426 = vmatpush1.xpose.msra.mxu0 0.0
        %427 = vmatprep.subr.mxu0 0.0
        %428 = vmatpush1.xpose.msra.mxu0 0.0
        %429 = vmatprep.subr.mxu0 0.0
        %430 = vmatpush1.xpose.msra.mxu0 0.0
        %431 = vmatprep.subr.mxu0 0.0
        %432 = vmatpush1.xpose.msra.mxu0 0.0
        %433 = vmatprep.subr.mxu0 0.0
        %434 = vmatpush1.xpose.msra.mxu0 0.0
        %435 = vmatprep.subr.mxu0 0.0
        %436 = vmatpush1.xpose.msra.mxu0 0.0
        %437 = vmatprep.subr.mxu0 0.0
        %438 = vmatpush1.xpose.msra.mxu0 0.0
        %439 = vmatprep.subr.mxu0 0.0
        %440 = vmatpush1.xpose.msra.mxu0 0.0
        %441 = vmatprep.subr.mxu0 0.0
        %442 = vmatpush1.xpose.msra.mxu0 0.0
        %443 = vmatprep.subr.mxu0 0.0
        %444 = vmatpush1.xpose.msra.mxu0 0.0
        %445 = vmatprep.subr.mxu0 0.0
        %446 = vmatpush1.xpose.msra.mxu0 0.0
        %447 = vmatprep.subr.mxu0 0.0
        %448 = vmatpush1.xpose.msra.mxu0 0.0
        %449 = vmatprep.subr.mxu0 0.0
        %450 = vmatpush1.xpose.msra.mxu0 0.0
        %451 = vmatprep.subr.mxu0 0.0
        %452 = vmatpush1.xpose.msra.mxu0 0.0
        %453 = vmatprep.subr.mxu0 0.0
        %454 = vmatpush1.xpose.msra.mxu0 0.0
        %455 = vmatprep.subr.mxu0 0.0
        %456 = vmatpush1.xpose.msra.mxu0 0.0
        %457 = vmatprep.subr.mxu0 0.0
        %458 = vmatpush1.xpose.msra.mxu0 0.0
        %459 = vmatprep.subr.mxu0 0.0
        %460 = vmatpush1.xpose.msra.mxu0 0.0
        %461 = vmatprep.subr.mxu0 0.0
        %462 = vmatpush1.xpose.msra.mxu0 0.0
        %463 = vmatprep.subr.mxu0 0.0
        %464 = vmatpush1.xpose.msra.mxu0 0.0
        %465 = vmatprep.mubr.f32.mxu0 0.0
        %466 = vmatmul.mubr.f32.gmra.mrb[0].mxu0 %v396
        %v467 = vpop.f32.mrb[0].mxu0
        %v468 = vadd.f32 0.0, %v467
        %v469 = vpop.f32.mrb[0].mxu0
        %470 = vdwg.mxu0
        %v472 = vsel %vm394, %v389, 0
        %v475 = vsel %vm394, %v391, 0
        %477 = vmatprep.subr.mxu0 0.0
        %478 = vmatpush1.xpose.msra.mxu0 %v475
        %479 = vmatprep.subr.mxu0 0.0
        %480 = vmatpush1.xpose.msra.mxu0 0.0
        %481 = vmatprep.subr.mxu0 0.0
        %482 = vmatpush1.xpose.msra.mxu0 0.0
        %483 = vmatprep.subr.mxu0 0.0
        %484 = vmatpush1.xpose.msra.mxu0 0.0
        %485 = vmatprep.subr.mxu0 0.0
        %486 = vmatpush1.xpose.msra.mxu0 0.0
        %487 = vmatprep.subr.mxu0 0.0
        %488 = vmatpush1.xpose.msra.mxu0 0.0
        %489 = vmatprep.subr.mxu0 0.0
        %490 = vmatpush1.xpose.msra.mxu0 0.0
        %491 = vmatprep.subr.mxu0 0.0
        %492 = vmatpush1.xpose.msra.mxu0 0.0
        %493 = vmatprep.subr.mxu0 0.0
        %494 = vmatpush1.xpose.msra.mxu0 0.0
        %495 = vmatprep.subr.mxu0 0.0
        %496 = vmatpush1.xpose.msra.mxu0 0.0
        %497 = vmatprep.subr.mxu0 0.0
        %498 = vmatpush1.xpose.msra.mxu0 0.0
        %499 = vmatprep.subr.mxu0 0.0
        %500 = vmatpush1.xpose.msra.mxu0 0.0
        %501 = vmatprep.subr.mxu0 0.0
        %502 = vmatpush1.xpose.msra.mxu0 0.0
        %503 = vmatprep.subr.mxu0 0.0
        %504 = vmatpush1.xpose.msra.mxu0 0.0
        %505 = vmatprep.subr.mxu0 0.0
        %506 = vmatpush1.xpose.msra.mxu0 0.0
        %507 = vmatprep.subr.mxu0 0.0
        %508 = vmatpush1.xpose.msra.mxu0 0.0
        %509 = vmatprep.subr.mxu0 0.0
        %510 = vmatpush1.xpose.msra.mxu0 0.0
        %511 = vmatprep.subr.mxu0 0.0
        %512 = vmatpush1.xpose.msra.mxu0 0.0
        %513 = vmatprep.subr.mxu0 0.0
        %514 = vmatpush1.xpose.msra.mxu0 0.0
        %515 = vmatprep.subr.mxu0 0.0
        %516 = vmatpush1.xpose.msra.mxu0 0.0
        %517 = vmatprep.subr.mxu0 0.0
        %518 = vmatpush1.xpose.msra.mxu0 0.0
        %519 = vmatprep.subr.mxu0 0.0
        %520 = vmatpush1.xpose.msra.mxu0 0.0
        %521 = vmatprep.subr.mxu0 0.0
        %522 = vmatpush1.xpose.msra.mxu0 0.0
        %523 = vmatprep.subr.mxu0 0.0
        %524 = vmatpush1.xpose.msra.mxu0 0.0
        %525 = vmatprep.subr.mxu0 0.0
        %526 = vmatpush1.xpose.msra.mxu0 0.0
        %527 = vmatprep.subr.mxu0 0.0
        %528 = vmatpush1.xpose.msra.mxu0 0.0
        %529 = vmatprep.subr.mxu0 0.0
        %530 = vmatpush1.xpose.msra.mxu0 0.0
        %531 = vmatprep.subr.mxu0 0.0
        %532 = vmatpush1.xpose.msra.mxu0 0.0
        %533 = vmatprep.subr.mxu0 0.0
        %534 = vmatpush1.xpose.msra.mxu0 0.0
        %535 = vmatprep.subr.mxu0 0.0
        %536 = vmatpush1.xpose.msra.mxu0 0.0
        %537 = vmatprep.subr.mxu0 0.0
        %538 = vmatpush1.xpose.msra.mxu0 0.0
        %539 = vmatprep.subr.mxu0 0.0
        %540 = vmatpush1.xpose.msra.mxu0 0.0
        %541 = vmatprep.mubr.f32.mxu0 0.0
        %542 = vmatmul.mubr.f32.gmra.mrb[0].mxu0 %v472
        %v543 = vpop.f32.mrb[0].mxu0
        %v544 = vadd.f32 0.0, %v543
        %v545 = vpop.f32.mrb[0].mxu0
        %546 = vdwg.mxu0
        %v547 = vld [vmem:[%s344] sm:$0xff]
        %vm548 = vcmp.ne.f32.partialorder %v547, 0.0
        %v549 = vsel %vm548, 1, 0
        %vm550 = vcmp.eq.s32.totalorder %v549, 1
        %v551 = vsel %vm550, %v468, -1e+09
        %v552 = vsel %vm550, %v544, -1e+09
        %vm553 = vcmask 64512
        %v554 = vsel %vm553, %v551, -inf
        %555 = vmax.xlane.f32.xlu0 %v554
        %v556 = vpop.xlane.xlu0 %555
        %v557 = vsel %vm553, %v552, -inf
        %558 = vmax.xlane.f32.xlu0 %v557
        %v559 = vpop.xlane.xlu0 %558
        %v560 = vsub.f32 %v551, %v556
        %v561 = vsub.f32 %v552, %v559
        %v562 = vmul.f32 %v560, 1.442695
        %v563 = vpow.pop %v562
        %v564 = vmul.f32 %v561, 1.442695
        %v565 = vpow.pop %v564
        %v566 = vsel %vm553, %v563, 0.0
        %567 = vadd.xlane.f32.xlu0 %v566
        %v568 = vpop.xlane.xlu0 %567
        %v569 = vsel %vm553, %v565, 0.0
        %570 = vadd.xlane.f32.xlu0 %v569
        %v571 = vpop.xlane.xlu0 %570
        %v572 = vrcp.pop %v568
        %v573 = vmul.f32 1.0, %v572
        %v574 = vrcp.pop %v571
        %v575 = vmul.f32 1.0, %v574
        %v576 = vmul.f32 %v563, %v573
        %v577 = vmul.f32 %v565, %v575
        %v579 = vsel %vm553, %v576, 0
        %581 = vmatprep.subr.mxu0 0.0
        %582 = vmatpush1.msra.mxu0 %v392
        %583 = vmatprep.subr.mxu0 0.0
        %584 = vmatpush1.msra.mxu0 0.0
        %585 = vmatprep.subr.mxu0 0.0
        %586 = vmatpush1.msra.mxu0 0.0
        %587 = vmatprep.subr.mxu0 0.0
        %588 = vmatpush1.msra.mxu0 0.0
        %589 = vmatprep.subr.mxu0 0.0
        %590 = vmatpush1.msra.mxu0 0.0
        %591 = vmatprep.subr.mxu0 0.0
        %592 = vmatpush1.msra.mxu0 0.0
        %593 = vmatprep.subr.mxu0 0.0
        %594 = vmatpush1.msra.mxu0 0.0
        %595 = vmatprep.subr.mxu0 0.0
        %596 = vmatpush1.msra.mxu0 0.0
        %597 = vmatprep.subr.mxu0 0.0
        %598 = vmatpush1.msra.mxu0 0.0
        %599 = vmatprep.subr.mxu0 0.0
        %600 = vmatpush1.msra.mxu0 0.0
        %601 = vmatprep.subr.mxu0 0.0
        %602 = vmatpush1.msra.mxu0 0.0
        %603 = vmatprep.subr.mxu0 0.0
        %604 = vmatpush1.msra.mxu0 0.0
        %605 = vmatprep.subr.mxu0 0.0
        %606 = vmatpush1.msra.mxu0 0.0
        %607 = vmatprep.subr.mxu0 0.0
        %608 = vmatpush1.msra.mxu0 0.0
        %609 = vmatprep.subr.mxu0 0.0
        %610 = vmatpush1.msra.mxu0 0.0
        %611 = vmatprep.subr.mxu0 0.0
        %612 = vmatpush1.msra.mxu0 0.0
        %613 = vmatprep.subr.mxu0 0.0
        %614 = vmatpush1.msra.mxu0 0.0
        %615 = vmatprep.subr.mxu0 0.0
        %616 = vmatpush1.msra.mxu0 0.0
        %617 = vmatprep.subr.mxu0 0.0
        %618 = vmatpush1.msra.mxu0 0.0
        %619 = vmatprep.subr.mxu0 0.0
        %620 = vmatpush1.msra.mxu0 0.0
        %621 = vmatprep.subr.mxu0 0.0
        %622 = vmatpush1.msra.mxu0 0.0
        %623 = vmatprep.subr.mxu0 0.0
        %624 = vmatpush1.msra.mxu0 0.0
        %625 = vmatprep.subr.mxu0 0.0
        %626 = vmatpush1.msra.mxu0 0.0
        %627 = vmatprep.subr.mxu0 0.0
        %628 = vmatpush1.msra.mxu0 0.0
        %629 = vmatprep.subr.mxu0 0.0
        %630 = vmatpush1.msra.mxu0 0.0
        %631 = vmatprep.subr.mxu0 0.0
        %632 = vmatpush1.msra.mxu0 0.0
        %633 = vmatprep.subr.mxu0 0.0
        %634 = vmatpush1.msra.mxu0 0.0
        %635 = vmatprep.subr.mxu0 0.0
        %636 = vmatpush1.msra.mxu0 0.0
        %637 = vmatprep.subr.mxu0 0.0
        %638 = vmatpush1.msra.mxu0 0.0
        %639 = vmatprep.subr.mxu0 0.0
        %640 = vmatpush1.msra.mxu0 0.0
        %641 = vmatprep.subr.mxu0 0.0
        %642 = vmatpush1.msra.mxu0 0.0
        %643 = vmatprep.subr.mxu0 0.0
        %644 = vmatpush1.msra.mxu0 0.0
        %645 = vmatprep.mubr.f32.mxu0 0.0
        %646 = vmatmul.mubr.f32.gmra.mrb[0].mxu0 %v579
        %v647 = vpop.f32.mrb[0].mxu0
        %v648 = vadd.f32 0.0, %v647
        %v649 = vpop.f32.mrb[0].mxu0
        %650 = vdwg.mxu0
        %v652 = vsel %vm553, %v577, 0
        %654 = vmatprep.subr.mxu0 0.0
        %655 = vmatpush1.msra.mxu0 %v393
        %656 = vmatprep.subr.mxu0 0.0
        %657 = vmatpush1.msra.mxu0 0.0
        %658 = vmatprep.subr.mxu0 0.0
        %659 = vmatpush1.msra.mxu0 0.0
        %660 = vmatprep.subr.mxu0 0.0
        %661 = vmatpush1.msra.mxu0 0.0
        %662 = vmatprep.subr.mxu0 0.0
        %663 = vmatpush1.msra.mxu0 0.0
        %664 = vmatprep.subr.mxu0 0.0
        %665 = vmatpush1.msra.mxu0 0.0
        %666 = vmatprep.subr.mxu0 0.0
        %667 = vmatpush1.msra.mxu0 0.0
        %668 = vmatprep.subr.mxu0 0.0
        %669 = vmatpush1.msra.mxu0 0.0
        %670 = vmatprep.subr.mxu0 0.0
        %671 = vmatpush1.msra.mxu0 0.0
        %672 = vmatprep.subr.mxu0 0.0
        %673 = vmatpush1.msra.mxu0 0.0
        %674 = vmatprep.subr.mxu0 0.0
        %675 = vmatpush1.msra.mxu0 0.0
        %676 = vmatprep.subr.mxu0 0.0
        %677 = vmatpush1.msra.mxu0 0.0
        %678 = vmatprep.subr.mxu0 0.0
        %679 = vmatpush1.msra.mxu0 0.0
        %680 = vmatprep.subr.mxu0 0.0
        %681 = vmatpush1.msra.mxu0 0.0
        %682 = vmatprep.subr.mxu0 0.0
        %683 = vmatpush1.msra.mxu0 0.0
        %684 = vmatprep.subr.mxu0 0.0
        %685 = vmatpush1.msra.mxu0 0.0
        %686 = vmatprep.subr.mxu0 0.0
        %687 = vmatpush1.msra.mxu0 0.0
        %688 = vmatprep.subr.mxu0 0.0
        %689 = vmatpush1.msra.mxu0 0.0
        %690 = vmatprep.subr.mxu0 0.0
        %691 = vmatpush1.msra.mxu0 0.0
        %692 = vmatprep.subr.mxu0 0.0
        %693 = vmatpush1.msra.mxu0 0.0
        %694 = vmatprep.subr.mxu0 0.0
        %695 = vmatpush1.msra.mxu0 0.0
        %696 = vmatprep.subr.mxu0 0.0
        %697 = vmatpush1.msra.mxu0 0.0
        %698 = vmatprep.subr.mxu0 0.0
        %699 = vmatpush1.msra.mxu0 0.0
        %700 = vmatprep.subr.mxu0 0.0
        %701 = vmatpush1.msra.mxu0 0.0
        %702 = vmatprep.subr.mxu0 0.0
        %703 = vmatpush1.msra.mxu0 0.0
        %704 = vmatprep.subr.mxu0 0.0
        %705 = vmatpush1.msra.mxu0 0.0
        %706 = vmatprep.subr.mxu0 0.0
        %707 = vmatpush1.msra.mxu0 0.0
        %708 = vmatprep.subr.mxu0 0.0
        %709 = vmatpush1.msra.mxu0 0.0
        %710 = vmatprep.subr.mxu0 0.0
        %711 = vmatpush1.msra.mxu0 0.0
        %712 = vmatprep.subr.mxu0 0.0
        %713 = vmatpush1.msra.mxu0 0.0
        %714 = vmatprep.subr.mxu0 0.0
        %715 = vmatpush1.msra.mxu0 0.0
        %716 = vmatprep.subr.mxu0 0.0
        %717 = vmatpush1.msra.mxu0 0.0
        %718 = vmatprep.mubr.f32.mxu0 0.0
        %719 = vmatmul.mubr.f32.gmra.mrb[0].mxu0 %v652
        %v720 = vpop.f32.mrb[0].mxu0
        %v721 = vadd.f32 0.0, %v720
        %v722 = vpop.f32.mrb[0].mxu0
        %723 = vdwg.mxu0
        %724 = vst.msk [vmem:[%s373] sm:$0xff] %vm394, %v648
        %725 = vst.msk [vmem:[%s373 + $0x8] sm:$0xff] %vm394, %v721
        %726 = vst.msk [vmem:[%s380] sm:$0xff] %vm553, %v576
        %727 = vst.msk [vmem:[%s380 + $0x8] sm:$0xff] %vm553, %v577
        %s728 = sand.u32 %s175, 1
        %s729 = scalar_lea.sflag [#allocation4], %s728
        %s730 = sand.u32 %s175, 1
        %s731 = smul.addr %s730, 16
        %s732 = scalar_lea.vmem [#allocation10], %s731
        %s733 = sand.u32 %s205, 1
        %s734 = scalar_lea.sflag [#allocation12], %s733
        %s735 = sand.u32 %s205, 1
        %s736 = smul.addr %s735, 16
        %s737 = scalar_lea.vmem [#allocation11], %s736
        // Predicated region
        $region53: #{tpu_custom_call.1} parent=35 // pred_check
          %p738 = pneg %p185
        $region54: #{tpu_custom_call.1} parent=35 // pred_check_branch
          %740 = sbr.rel (%p738) target = $region56
        $region55: #{tpu_custom_call.1} parent=35 // pred_region
          %s741 = smul.u32 2, %s36
          %s743 = ssub.s32 256, 256
          %744 = vsyncadd %s729, %s743
          %s745 = sadd.s32 %s37, %s741
          %s746 = smul.addr %s35, 2
          %s747 = sadd.s32 %s745, %s746
          %s748 = smul.addr %s747, 128
          %s749 = scalar_lea.hbm %s4, %s748
          %s750 = sshll.u32 %s732, 4
          %s751 = int_to_ptr.vmem [resolvable:$true] %s750
          %756 = dma.vmem_to_hbm [thread:$0]  %s751, 256, %s749, %s729, 128, 128, 8
        $region56: #{tpu_custom_call.1} parent=35 // pred_fallthru
          _
        // Predicated region
        $region57: #{tpu_custom_call.1} parent=35 // pred_check
          %p757 = pneg %p215
        $region58: #{tpu_custom_call.1} parent=35 // pred_check_branch
          %759 = sbr.rel (%p757) target = $region60
        $region59: #{tpu_custom_call.1} parent=35 // pred_region
          %s760 = smul.u32 2, %s36
          %s762 = ssub.s32 256, 256
          %763 = vsyncadd %s734, %s762
          %s764 = sadd.s32 %s37, %s760
          %s765 = smul.addr %s35, 2
          %s766 = sadd.s32 %s764, %s765
          %s767 = smul.addr %s766, 128
          %s768 = scalar_lea.hbm %s5, %s767
          %s769 = sshll.u32 %s737, 4
          %s770 = int_to_ptr.vmem [resolvable:$true] %s769
          %775 = dma.vmem_to_hbm [thread:$0]  %s770, 256, %s768, %s734, 128, 128, 8
        $region60: #{tpu_custom_call.1} parent=35 // pred_fallthru
          _
      $region36: #{tpu_custom_call.1} parent=5 // pred_fallthru
        _
      %p776 = scmp.le.s32.totalorder 2, %s25
      // Predicated region
      $region61: #{tpu_custom_call.1} parent=5 // pred_check
        %p777 = pneg %p776
      $region62: #{tpu_custom_call.1} parent=5 // pred_check_branch
        %779 = sbr.rel (%p777) target = $region64
      $region63: #{tpu_custom_call.1} parent=5 // pred_region
        %s780 = ssub.s32 %s25, 2
        // Predicated region
        $region65: #{tpu_custom_call.1} parent=63 // pred_check
          %p781 = pneg %p191
        $region66: #{tpu_custom_call.1} parent=63 // pred_check_branch
          %783 = sbr.rel (%p781) target = $region68
        $region67: #{tpu_custom_call.1} parent=63 // pred_region
          %s784 = sand.u32 %s176, 1
          %s785 = scalar_lea.sflag [#allocation4], %s784
          %s786 = sand.u32 %s176, 1
          %s787 = smul.addr %s786, 16
          %s788 = scalar_lea.vmem [#allocation10], %s787
          %789 = dma.done %s785, 256
        $region68: #{tpu_custom_call.1} parent=63 // pred_fallthru
          _
        // Predicated region
        $region69: #{tpu_custom_call.1} parent=63 // pred_check
          %p790 = pneg %p221
        $region70: #{tpu_custom_call.1} parent=63 // pred_check_branch
          %792 = sbr.rel (%p790) target = $region72
        $region71: #{tpu_custom_call.1} parent=63 // pred_region
          %s793 = sand.u32 %s206, 1
          %s794 = scalar_lea.sflag [#allocation12], %s793
          %s795 = sand.u32 %s206, 1
          %s796 = smul.addr %s795, 16
          %s797 = scalar_lea.vmem [#allocation11], %s796
          %798 = dma.done %s794, 256
        $region72: #{tpu_custom_call.1} parent=63 // pred_fallthru
          _
      $region64: #{tpu_custom_call.1} parent=5 // pred_fallthru
        _
    $region6: #{tpu_custom_call.1} parent=1 // loop_footer
      %s29 = sadd.s32 1, %s25
    $region7: #{tpu_custom_call.1} parent=1 // loop_footer_branch
      %24 = sbr.rel target = $region3
    $region8: #{tpu_custom_call.1} parent=1 // loop_exit
      _
    %799 = vsyncpa [#allocation3], 1
    %s800 = scalar_lea.sflag [#allocation3], 1
    %801 = vsyncpa %s800, 1
    %802 = vsyncpa [#allocation6], 1
    %803 = vsyncpa [#allocation9], 1
    %s804 = scalar_lea.sflag [#allocation9], 1
    %805 = vsyncpa %s804, 1
    %806 = vsyncpa [#allocation4], 1
    %s807 = scalar_lea.sflag [#allocation4], 1
    %808 = vsyncpa %s807, 1
    %809 = vsyncpa [#allocation12], 1
    %s810 = scalar_lea.sflag [#allocation12], 1
    %811 = vsyncpa %s810, 1

// kernel: tpu_custom_call.1
$region0: #{tpu_custom_call.1}
  #allocation0 [shape = 'u32[]', space=smem, size = 0x4, offset = 0x4, fixed_abs, tag = 'smem constant byte address 0x4 - core index']
  #allocation1 [shape = 'u32[144,128]{1,0:T(1,128)}', space=vmem, size = 0x12000, scoped, tag = 'internal scratch']
  %s0 = inlined_call_operand.hbm [shape: f32[2,2,8,32], index: 0, kind: input, shape index: {}]
  %s1 = inlined_call_operand.hbm [shape: f32[2,2,8,32], index: 1, kind: input, shape index: {}]
  %s2 = inlined_call_operand.hbm [shape: f32[2,2,8,32], index: 2, kind: input, shape index: {}]
  %s3 = inlined_call_operand.hbm [shape: f32[2,8,8], index: 3, kind: input, shape index: {}]
  %s4 = inlined_call_operand.hbm [shape: f32[2,2,8,32], index: 4, kind: output, shape index: {0}]
  %s5 = inlined_call_operand.hbm [shape: f32[2,2,8,8], index: 5, kind: output, shape index: {1}]
  %6 = xla_tuple %s4, %s5
  %s7 = sld [smem:[#allocation0]]
  $region73: #{tpu_custom_call.1} parent=0
    _
  %s9 = ssub.s32 1, %s7
  %s10 = scalar_select 0, %s9, %s7
  $region1: #{tpu_custom_call.1} parent=0
    #allocation2 [shape = 'u8[16384]{0}', space=vmem, size = 0x4000, scoped, tag = 'input window, operand 0']
    #allocation3 [shape = 's32[2]{0}', space=sflag, size = 0x8, scoped, tag = 'scoped memory for tpu_custom_call.1']
    #allocation4 [shape = 's32[2]{0}', space=sflag, size = 0x8, scoped, tag = 'scoped memory for tpu_custom_call.1']
    #allocation5 [shape = 'u8[16384]{0}', space=vmem, size = 0x4000, scoped, tag = 'input window, operand 1']
    #allocation6 [shape = 's32[2]{0}', space=sflag, size = 0x8, scoped, tag = 'scoped memory for tpu_custom_call.1']
    #allocation7 [shape = 'u8[16384]{0}', space=vmem, size = 0x4000, scoped, tag = 'input window, operand 2']
    #allocation8 [shape = 'u8[8192]{0}', space=vmem, size = 0x2000, scoped, tag = 'input window, operand 3']
    #allocation9 [shape = 's32[2]{0}', space=sflag, size = 0x8, scoped, tag = 'scoped memory for tpu_custom_call.1']
    #allocation10 [shape = 'u8[16384]{0}', space=vmem, size = 0x4000, scoped, tag = 'output window, operand 0']
    #allocation11 [shape = 'u8[16384]{0}', space=vmem, size = 0x4000, scoped, tag = 'output window, operand 1']
    #allocation12 [shape = 's32[2]{0}', space=sflag, size = 0x8, scoped, tag = 'scoped memory for tpu_custom_call.1']
    %11 = vsyncpa [#allocation3], 0
    %s12 = scalar_lea.sflag [#allocation3], 1
    %13 = vsyncpa %s12, 0
    %14 = vsyncpa [#allocation6], 0
    %s15 = scalar_lea.sflag [#allocation6], 1
    %16 = vsyncpa %s15, 0
    %17 = vsyncpa [#allocation9], 0
    %s18 = scalar_lea.sflag [#allocation9], 1
    %19 = vsyncpa %s18, 0
    %20 = vsyncpa [#allocation4], 0
    %s21 = scalar_lea.sflag [#allocation4], 1
    %22 = vsyncpa %s21, 0
    %23 = vsyncpa [#allocation12], 0
    %s24 = scalar_lea.sflag [#allocation12], 1
    %25 = vsyncpa %s24, 0
    loop: start=0, step=1, limit=4
    $region2: #{tpu_custom_call.1} parent=1 // loop_pre_header
      _
    $region3: #{tpu_custom_call.1} parent=1 // loop_header
      %s27 = sphi 0, %s31
      %p28 = scmp.ge.s32.totalorder %s27, 4
      %s34 = sphi 0, %s53
      %s35 = sphi 0, %s49
      %s36 = sphi 0, %s45
      %s37 = sphi 0, %s34
      %s38 = sphi 0, %s35
      %s39 = sphi 0, %s36
      %s40 = sphi 0, %s37
      %s41 = sphi 0, %s38
      %s42 = sphi 0, %s39
      %s60 = sphi 0, %s62
      %s63 = sphi 0, %s60
      %s64 = sphi 0, %s63
      %s80 = sphi 0, %s64
      %s88 = sphi 0, %s90
      %s91 = sphi 0, %s88
      %s92 = sphi 0, %s91
      %s108 = sphi 0, %s92
      %s116 = sphi 0, %s118
      %s119 = sphi 0, %s116
      %s120 = sphi 0, %s119
      %s136 = sphi 0, %s120
      %s144 = sphi 0, %s146
      %s147 = sphi 0, %s144
      %s148 = sphi 0, %s147
      %s164 = sphi 0, %s148
      %s174 = sphi 0, %s176
      %s177 = sphi 0, %s174
      %s178 = sphi 0, %s177
      %s194 = sphi 0, %s178
      %s204 = sphi 0, %s206
      %s207 = sphi 0, %s204
      %s208 = sphi 0, %s207
      %s224 = sphi 0, %s208
    $region4: #{tpu_custom_call.1} parent=1 // loop_header_branch
      %30 = sbr.rel (%p28) target = $region8
    $region5: #{tpu_custom_call.1} parent=1 // loop_body
      %s32 = ssub.s32 %s27, 1
      %s33 = ssub.s32 %s27, 2
      %s43 = sadd.s32 1, %s36
      %p44 = scmp.ge.s32.totalorder %s43, 1
      %s45 = scalar_select %p44, 0, %s43
      %s46 = sadd.s32 1, %s35
      %s47 = scalar_select %p44, %s46, %s35
      %p48 = scmp.ge.s32.totalorder %s47, 1
      %s49 = scalar_select %p48, 0, %s47
      %s50 = sadd.s32 1, %s34
      %s51 = scalar_select %p48, %s50, %s34
      %p52 = scmp.ge.s32.totalorder %s51, 2
      %s53 = scalar_select %p52, 0, %s51
      %s54 = ssub.s32 %s34, %s53
      %s55 = ssub.s32 %s35, %s49
      %s56 = sor.u32 %s54, %s55
      %s57 = ssub.s32 %s36, %s45
      %s58 = sor.u32 %s56, %s57
      %p59 = scmp.eq.s32.totalorder %s58, 0
      %s61 = sadd.s32 %s60, 1
      %s62 = scalar_select %p59, %s60, %s61
      %p65 = pneg %p59
      %p66 = scmp.eq.s32.totalorder %s27, 1
      %p67 = por %p65, %p66
      %p68 = scmp.ne.s32.totalorder %s60, %s63
      %p69 = scmp.eq.s32.totalorder %s27, 0
      %p70 = por %p68, %p69
      %p71 = scmp.ne.s32.totalorder %s60, %s63
      %p72 = scmp.eq.s32.totalorder %s32, 1
      %p73 = por %p71, %p72
      %p74 = scmp.ne.s32.totalorder %s63, %s64
      %p75 = scmp.eq.s32.totalorder %s32, 0
      %p76 = por %p74, %p75
      %p77 = scmp.ne.s32.totalorder %s63, %s64
      %p78 = scmp.eq.s32.totalorder %s33, 1
      %p79 = por %p77, %p78
      %p81 = scmp.ne.s32.totalorder %s64, %s80
      %p82 = scmp.eq.s32.totalorder %s33, 0
      %p83 = por %p81, %p82
      %s84 = ssub.s32 %s34, %s53
      %s85 = ssub.s32 %s35, %s49
      %s86 = sor.u32 %s84, %s85
      %p87 = scmp.eq.s32.totalorder %s86, 0
      %s89 = sadd.s32 %s88, 1
      %s90 = scalar_select %p87, %s88, %s89
      %p93 = pneg %p87
      %p94 = scmp.eq.s32.totalorder %s27, 1
      %p95 = por %p93, %p94
      %p96 = scmp.ne.s32.totalorder %s88, %s91
      %p97 = scmp.eq.s32.totalorder %s27, 0
      %p98 = por %p96, %p97
      %p99 = scmp.ne.s32.totalorder %s88, %s91
      %p100 = scmp.eq.s32.totalorder %s32, 1
      %p101 = por %p99, %p100
      %p102 = scmp.ne.s32.totalorder %s91, %s92
      %p103 = scmp.eq.s32.totalorder %s32, 0
      %p104 = por %p102, %p103
      %p105 = scmp.ne.s32.totalorder %s91, %s92
      %p106 = scmp.eq.s32.totalorder %s33, 1
      %p107 = por %p105, %p106
      %p109 = scmp.ne.s32.totalorder %s92, %s108
      %p110 = scmp.eq.s32.totalorder %s33, 0
      %p111 = por %p109, %p110
      %s112 = ssub.s32 %s34, %s53
      %s113 = ssub.s32 %s35, %s49
      %s114 = sor.u32 %s112, %s113
      %p115 = scmp.eq.s32.totalorder %s114, 0
      %s117 = sadd.s32 %s116, 1
      %s118 = scalar_select %p115, %s116, %s117
      %p121 = pneg %p115
      %p122 = scmp.eq.s32.totalorder %s27, 1
      %p123 = por %p121, %p122
      %p124 = scmp.ne.s32.totalorder %s116, %s119
      %p125 = scmp.eq.s32.totalorder %s27, 0
      %p126 = por %p124, %p125
      %p127 = scmp.ne.s32.totalorder %s116, %s119
      %p128 = scmp.eq.s32.totalorder %s32, 1
      %p129 = por %p127, %p128
      %p130 = scmp.ne.s32.totalorder %s119, %s120
      %p131 = scmp.eq.s32.totalorder %s32, 0
      %p132 = por %p130, %p131
      %p133 = scmp.ne.s32.totalorder %s119, %s120
      %p134 = scmp.eq.s32.totalorder %s33, 1
      %p135 = por %p133, %p134
      %p137 = scmp.ne.s32.totalorder %s120, %s136
      %p138 = scmp.eq.s32.totalorder %s33, 0
      %p139 = por %p137, %p138
      %s140 = ssub.s32 %s34, %s53
      %s141 = ssub.s32 %s36, %s45
      %s142 = sor.u32 %s140, %s141
      %p143 = scmp.eq.s32.totalorder %s142, 0
      %s145 = sadd.s32 %s144, 1
      %s146 = scalar_select %p143, %s144, %s145
      %p149 = pneg %p143
      %p150 = scmp.eq.s32.totalorder %s27, 1
      %p151 = por %p149, %p150
      %p152 = scmp.ne.s32.totalorder %s144, %s147
      %p153 = scmp.eq.s32.totalorder %s27, 0
      %p154 = por %p152, %p153
      %p155 = scmp.ne.s32.totalorder %s144, %s147
      %p156 = scmp.eq.s32.totalorder %s32, 1
      %p157 = por %p155, %p156
      %p158 = scmp.ne.s32.totalorder %s147, %s148
      %p159 = scmp.eq.s32.totalorder %s32, 0
      %p160 = por %p158, %p159
      %p161 = scmp.ne.s32.totalorder %s147, %s148
      %p162 = scmp.eq.s32.totalorder %s33, 1
      %p163 = por %p161, %p162
      %p165 = scmp.ne.s32.totalorder %s148, %s164
      %p166 = scmp.eq.s32.totalorder %s33, 0
      %p167 = por %p165, %p166
      %s168 = ssub.s32 %s34, %s53
      %s169 = ssub.s32 %s35, %s49
      %s170 = sor.u32 %s168, %s169
      %s171 = ssub.s32 %s36, %s45
      %s172 = sor.u32 %s170, %s171
      %p173 = scmp.eq.s32.totalorder %s172, 0
      %s175 = sadd.s32 %s174, 1
      %s176 = scalar_select %p173, %s174, %s175
      %p179 = pneg %p173
      %p180 = scmp.eq.s32.totalorder %s27, 1
      %p181 = por %p179, %p180
      %p182 = scmp.ne.s32.totalorder %s174, %s177
      %p183 = scmp.eq.s32.totalorder %s27, 0
      %p184 = por %p182, %p183
      %p185 = scmp.ne.s32.totalorder %s174, %s177
      %p186 = scmp.eq.s32.totalorder %s32, 1
      %p187 = por %p185, %p186
      %p188 = scmp.ne.s32.totalorder %s177, %s178
      %p189 = scmp.eq.s32.totalorder %s32, 0
      %p190 = por %p188, %p189
      %p191 = scmp.ne.s32.totalorder %s177, %s178
      %p192 = scmp.eq.s32.totalorder %s33, 1
      %p193 = por %p191, %p192
      %p195 = scmp.ne.s32.totalorder %s178, %s194
      %p196 = scmp.eq.s32.totalorder %s33, 0
      %p197 = por %p195, %p196
      %s198 = ssub.s32 %s34, %s53
      %s199 = ssub.s32 %s35, %s49
      %s200 = sor.u32 %s198, %s199
      %s201 = ssub.s32 %s36, %s45
      %s202 = sor.u32 %s200, %s201
      %p203 = scmp.eq.s32.totalorder %s202, 0
      %s205 = sadd.s32 %s204, 1
      %s206 = scalar_select %p203, %s204, %s205
      %p209 = pneg %p203
      %p210 = scmp.eq.s32.totalorder %s27, 1
      %p211 = por %p209, %p210
      %p212 = scmp.ne.s32.totalorder %s204, %s207
      %p213 = scmp.eq.s32.totalorder %s27, 0
      %p214 = por %p212, %p213
      %p215 = scmp.ne.s32.totalorder %s204, %s207
      %p216 = scmp.eq.s32.totalorder %s32, 1
      %p217 = por %p215, %p216
      %p218 = scmp.ne.s32.totalorder %s207, %s208
      %p219 = scmp.eq.s32.totalorder %s32, 0
      %p220 = por %p218, %p219
      %p221 = scmp.ne.s32.totalorder %s207, %s208
      %p222 = scmp.eq.s32.totalorder %s33, 1
      %p223 = por %p221, %p222
      %p225 = scmp.ne.s32.totalorder %s208, %s224
      %p226 = scmp.eq.s32.totalorder %s33, 0
      %p227 = por %p225, %p226
      %p228 = scmp.le.s32.totalorder 1, %s27
      %p229 = scmp.lt.s32.totalorder %s27, 3
      %p230 = pnand %p228, %p229
      %p231 = pneg %p230
      // Predicated region
      $region9: #{tpu_custom_call.1} parent=5 // pred_check
        _
      $region10: #{tpu_custom_call.1} parent=5 // pred_check_branch
        %233 = sbr.rel (%p230) target = $region12
      $region11: #{tpu_custom_call.1} parent=5 // pred_region
        %s234 = ssub.s32 %s27, 1
      $region12: #{tpu_custom_call.1} parent=5 // pred_fallthru
        _
      %p235 = scmp.lt.s32.totalorder %s27, 2
      // Predicated region
      $region13: #{tpu_custom_call.1} parent=5 // pred_check
        %p236 = pneg %p235
      $region14: #{tpu_custom_call.1} parent=5 // pred_check_branch
        %238 = sbr.rel (%p236) target = $region16
      $region15: #{tpu_custom_call.1} parent=5 // pred_region
        // Predicated region
        $region17: #{tpu_custom_call.1} parent=15 // pred_check
          %p239 = pneg %p70
        $region18: #{tpu_custom_call.1} parent=15 // pred_check_branch
          %241 = sbr.rel (%p239) target = $region20
        $region19: #{tpu_custom_call.1} parent=15 // pred_region
          %s242 = sand.u32 %s60, 1
          %s243 = scalar_lea.sflag [#allocation3], %s242
          %s244 = sand.u32 %s60, 1
          %s245 = smul.addr %s244, 16
          %s246 = scalar_lea.vmem [#allocation2], %s245
          %s247 = smul.u32 2, %s35
          %s249 = ssub.s32 256, 256
          %250 = vsyncadd %s243, %s249
          %s251 = sadd.s32 %s36, %s247
          %s252 = smul.addr %s34, 2
          %s253 = sadd.s32 %s251, %s252
          %s254 = smul.addr %s253, 128
          %s255 = scalar_lea.hbm %s0, %s254
          %s256 = sshll.u32 %s246, 4
          %s257 = int_to_ptr.vmem [resolvable:$true] %s256
          %262 = dma.hbm_to_vmem [thread:$0]  %s255, 256, %s257, %s243, 128, 128, 8
        $region20: #{tpu_custom_call.1} parent=15 // pred_fallthru
          _
        // Predicated region
        $region21: #{tpu_custom_call.1} parent=15 // pred_check
          %p263 = pneg %p98
        $region22: #{tpu_custom_call.1} parent=15 // pred_check_branch
          %265 = sbr.rel (%p263) target = $region24
        $region23: #{tpu_custom_call.1} parent=15 // pred_region
          %s266 = sand.u32 %s27, 1
          %s267 = scalar_lea.sflag [#allocation6], %s266
          %s268 = sand.u32 %s88, 1
          %s269 = smul.addr %s268, 16
          %s270 = scalar_lea.vmem [#allocation5], %s269
          %s271 = smul.u32 2, %s35
          %s273 = ssub.s32 256, 256
          %274 = vsyncadd %s267, %s273
          %s275 = smul.addr %s34, 2
          %s276 = sadd.s32 %s271, %s275
          %s277 = smul.addr %s276, 128
          %s278 = scalar_lea.hbm %s1, %s277
          %s279 = sshll.u32 %s270, 4
          %s280 = int_to_ptr.vmem [resolvable:$true] %s279
          %285 = dma.hbm_to_vmem [thread:$0]  %s278, 256, %s280, %s267, 128, 128, 8
        $region24: #{tpu_custom_call.1} parent=15 // pred_fallthru
          _
        // Predicated region
        $region25: #{tpu_custom_call.1} parent=15 // pred_check
          %p286 = pneg %p126
        $region26: #{tpu_custom_call.1} parent=15 // pred_check_branch
          %288 = sbr.rel (%p286) target = $region28
        $region27: #{tpu_custom_call.1} parent=15 // pred_region
          %s289 = sand.u32 %s27, 1
          %s290 = scalar_lea.sflag [#allocation6], %s289
          %s291 = sand.u32 %s116, 1
          %s292 = smul.addr %s291, 16
          %s293 = scalar_lea.vmem [#allocation7], %s292
          %s294 = smul.u32 2, %s35
          %s296 = ssub.s32 256, 256
          %297 = vsyncadd %s290, %s296
          %s298 = smul.addr %s34, 2
          %s299 = sadd.s32 %s294, %s298
          %s300 = smul.addr %s299, 128
          %s301 = scalar_lea.hbm %s2, %s300
          %s302 = sshll.u32 %s293, 4
          %s303 = int_to_ptr.vmem [resolvable:$true] %s302
          %308 = dma.hbm_to_vmem [thread:$0]  %s301, 256, %s303, %s290, 128, 128, 8
        $region28: #{tpu_custom_call.1} parent=15 // pred_fallthru
          _
        // Predicated region
        $region29: #{tpu_custom_call.1} parent=15 // pred_check
          %p309 = pneg %p154
        $region30: #{tpu_custom_call.1} parent=15 // pred_check_branch
          %311 = sbr.rel (%p309) target = $region32
        $region31: #{tpu_custom_call.1} parent=15 // pred_region
          %s312 = sand.u32 %s144, 1
          %s313 = scalar_lea.sflag [#allocation9], %s312
          %s314 = sand.u32 %s144, 1
          %s315 = smul.addr %s314, 8
          %s316 = scalar_lea.vmem [#allocation8], %s315
          %s318 = ssub.s32 128, 128
          %319 = vsyncadd %s313, %s318
          %s320 = sadd.s32 %s36, %s34
          %s321 = smul.addr %s320, 128
          %s322 = scalar_lea.hbm %s3, %s321
          %s324 = sshll.u32 %s316, 4
          %s325 = int_to_ptr.vmem [resolvable:$true] %s324
          %327 = dma.hbm_to_vmem [thread:$0]  %s322, 128, %s325, %s313
        $region32: #{tpu_custom_call.1} parent=15 // pred_fallthru
          _
      $region16: #{tpu_custom_call.1} parent=5 // pred_fallthru
        _
      %p328 = scmp.le.s32.totalorder 1, %s27
      %p329 = scmp.lt.s32.totalorder %s27, 3
      %p330 = pnand %p328, %p329
      %p331 = pneg %p330
      // Predicated region
      $region33: #{tpu_custom_call.1} parent=5 // pred_check
        _
      $region34: #{tpu_custom_call.1} parent=5 // pred_check_branch
        %333 = sbr.rel (%p330) target = $region36
      $region35: #{tpu_custom_call.1} parent=5 // pred_region
        %s334 = ssub.s32 %s27, 1
        %s335 = sand.u32 %s63, 1
        %s336 = scalar_lea.sflag [#allocation3], %s335
        %s337 = sand.u32 %s63, 1
        %s338 = smul.addr %s337, 16
        %s339 = scalar_lea.vmem [#allocation2], %s338
        // Predicated region
        $region37: #{tpu_custom_call.1} parent=35 // pred_check
          %p340 = pneg %p76
        $region38: #{tpu_custom_call.1} parent=35 // pred_check_branch
          %342 = sbr.rel (%p340) target = $region40
        $region39: #{tpu_custom_call.1} parent=35 // pred_region
          %343 = dma.done %s336, 256
        $region40: #{tpu_custom_call.1} parent=35 // pred_fallthru
          _
        %s344 = sand.u32 %s32, 1
        %s345 = scalar_lea.sflag [#allocation6], %s344
        %s346 = sand.u32 %s91, 1
        %s347 = smul.addr %s346, 16
        %s348 = scalar_lea.vmem [#allocation5], %s347
        // Predicated region
        $region41: #{tpu_custom_call.1} parent=35 // pred_check
          %p349 = pneg %p104
        $region42: #{tpu_custom_call.1} parent=35 // pred_check_branch
          %351 = sbr.rel (%p349) target = $region44
        $region43: #{tpu_custom_call.1} parent=35 // pred_region
          %352 = dma.done %s345, 256
        $region44: #{tpu_custom_call.1} parent=35 // pred_fallthru
          _
        %s353 = sand.u32 %s32, 1
        %s354 = scalar_lea.sflag [#allocation6], %s353
        %s355 = sand.u32 %s119, 1
        %s356 = smul.addr %s355, 16
        %s357 = scalar_lea.vmem [#allocation7], %s356
        // Predicated region
        $region45: #{tpu_custom_call.1} parent=35 // pred_check
          %p358 = pneg %p132
        $region46: #{tpu_custom_call.1} parent=35 // pred_check_branch
          %360 = sbr.rel (%p358) target = $region48
        $region47: #{tpu_custom_call.1} parent=35 // pred_region
          %361 = dma.done %s354, 256
        $region48: #{tpu_custom_call.1} parent=35 // pred_fallthru
          _
        %s362 = sand.u32 %s147, 1
        %s363 = scalar_lea.sflag [#allocation9], %s362
        %s364 = sand.u32 %s147, 1
        %s365 = smul.addr %s364, 8
        %s366 = scalar_lea.vmem [#allocation8], %s365
        // Predicated region
        $region49: #{tpu_custom_call.1} parent=35 // pred_check
          %p367 = pneg %p160
        $region50: #{tpu_custom_call.1} parent=35 // pred_check_branch
          %369 = sbr.rel (%p367) target = $region52
        $region51: #{tpu_custom_call.1} parent=35 // pred_region
          %370 = dma.done %s363, 128
        $region52: #{tpu_custom_call.1} parent=35 // pred_fallthru
          _
        %s371 = sand.u32 %s63, 1
        %s372 = scalar_lea.sflag [#allocation3], %s371
        %s373 = sand.u32 %s63, 1
        %s374 = smul.addr %s373, 16
        %s375 = scalar_lea.vmem [#allocation2], %s374
        %p376 = pneg %p76
        %p377 = pneg %p73
        %s378 = sand.u32 %s32, 1
        %s379 = scalar_lea.sflag [#allocation6], %s378
        %s380 = sand.u32 %s91, 1
        %s381 = smul.addr %s380, 16
        %s382 = scalar_lea.vmem [#allocation5], %s381
        %p383 = pneg %p104
        %p384 = pneg %p101
        %s385 = sand.u32 %s32, 1
        %s386 = scalar_lea.sflag [#allocation6], %s385
        %s387 = sand.u32 %s119, 1
        %s388 = smul.addr %s387, 16
        %s389 = scalar_lea.vmem [#allocation7], %s388
        %p390 = pneg %p132
        %p391 = pneg %p129
        %s392 = sand.u32 %s147, 1
        %s393 = scalar_lea.sflag [#allocation9], %s392
        %s394 = sand.u32 %s147, 1
        %s395 = smul.addr %s394, 8
        %s396 = scalar_lea.vmem [#allocation8], %s395
        %p397 = pneg %p160
        %p398 = pneg %p157
        %p399 = pneg %p190
        %p400 = pneg %p187
        %s401 = sand.u32 %s177, 1
        %s402 = scalar_lea.sflag [#allocation4], %s401
        %s403 = sand.u32 %s177, 1
        %s404 = smul.addr %s403, 16
        %s405 = scalar_lea.vmem [#allocation10], %s404
        %p406 = pneg %p220
        %p407 = pneg %p217
        %s408 = sand.u32 %s207, 1
        %s409 = scalar_lea.sflag [#allocation12], %s408
        %s410 = sand.u32 %s207, 1
        %s411 = smul.addr %s410, 16
        %s412 = scalar_lea.vmem [#allocation11], %s411
        %s413 = smul.u32 2, %s38
        %s414 = smul.u32 2, %s38
        %s415 = smul.u32 2, %s38
        %s416 = smul.u32 2, %s38
        %s417 = smul.u32 2, %s38
        %v418 = vld [vmem:[%s339] sm:$0xff]
        %v419 = vld [vmem:[%s339 + $0x8] sm:$0xff]
        %v420 = vmul.f32 %v418, 0.17677669
        %v421 = vmul.f32 %v419, 0.17677669
        %v422 = vld [vmem:[%s348] sm:$0xff]
        %v423 = vld [vmem:[%s348 + $0x8] sm:$0xff]
        %v424 = vld [vmem:[%s357] sm:$0xff]
        %v425 = vld [vmem:[%s357 + $0x8] sm:$0xff]
        %vm426 = vcmask 261120
        %v428 = vsel %vm426, %v420, 0
        %v431 = vsel %vm426, %v422, 0
        %433 = vmatprep.subr.mxu0 0.0
        %434 = vmatpush1.xpose.msra.mxu0 %v431
        %435 = vmatprep.subr.mxu0 0.0
        %436 = vmatpush1.xpose.msra.mxu0 0.0
        %437 = vmatprep.subr.mxu0 0.0
        %438 = vmatpush1.xpose.msra.mxu0 0.0
        %439 = vmatprep.subr.mxu0 0.0
        %440 = vmatpush1.xpose.msra.mxu0 0.0
        %441 = vmatprep.subr.mxu0 0.0
        %442 = vmatpush1.xpose.msra.mxu0 0.0
        %443 = vmatprep.subr.mxu0 0.0
        %444 = vmatpush1.xpose.msra.mxu0 0.0
        %445 = vmatprep.subr.mxu0 0.0
        %446 = vmatpush1.xpose.msra.mxu0 0.0
        %447 = vmatprep.subr.mxu0 0.0
        %448 = vmatpush1.xpose.msra.mxu0 0.0
        %449 = vmatprep.subr.mxu0 0.0
        %450 = vmatpush1.xpose.msra.mxu0 0.0
        %451 = vmatprep.subr.mxu0 0.0
        %452 = vmatpush1.xpose.msra.mxu0 0.0
        %453 = vmatprep.subr.mxu0 0.0
        %454 = vmatpush1.xpose.msra.mxu0 0.0
        %455 = vmatprep.subr.mxu0 0.0
        %456 = vmatpush1.xpose.msra.mxu0 0.0
        %457 = vmatprep.subr.mxu0 0.0
        %458 = vmatpush1.xpose.msra.mxu0 0.0
        %459 = vmatprep.subr.mxu0 0.0
        %460 = vmatpush1.xpose.msra.mxu0 0.0
        %461 = vmatprep.subr.mxu0 0.0
        %462 = vmatpush1.xpose.msra.mxu0 0.0
        %463 = vmatprep.subr.mxu0 0.0
        %464 = vmatpush1.xpose.msra.mxu0 0.0
        %465 = vmatprep.subr.mxu0 0.0
        %466 = vmatpush1.xpose.msra.mxu0 0.0
        %467 = vmatprep.subr.mxu0 0.0
        %468 = vmatpush1.xpose.msra.mxu0 0.0
        %469 = vmatprep.subr.mxu0 0.0
        %470 = vmatpush1.xpose.msra.mxu0 0.0
        %471 = vmatprep.subr.mxu0 0.0
        %472 = vmatpush1.xpose.msra.mxu0 0.0
        %473 = vmatprep.subr.mxu0 0.0
        %474 = vmatpush1.xpose.msra.mxu0 0.0
        %475 = vmatprep.subr.mxu0 0.0
        %476 = vmatpush1.xpose.msra.mxu0 0.0
        %477 = vmatprep.subr.mxu0 0.0
        %478 = vmatpush1.xpose.msra.mxu0 0.0
        %479 = vmatprep.subr.mxu0 0.0
        %480 = vmatpush1.xpose.msra.mxu0 0.0
        %481 = vmatprep.subr.mxu0 0.0
        %482 = vmatpush1.xpose.msra.mxu0 0.0
        %483 = vmatprep.subr.mxu0 0.0
        %484 = vmatpush1.xpose.msra.mxu0 0.0
        %485 = vmatprep.subr.mxu0 0.0
        %486 = vmatpush1.xpose.msra.mxu0 0.0
        %487 = vmatprep.subr.mxu0 0.0
        %488 = vmatpush1.xpose.msra.mxu0 0.0
        %489 = vmatprep.subr.mxu0 0.0
        %490 = vmatpush1.xpose.msra.mxu0 0.0
        %491 = vmatprep.subr.mxu0 0.0
        %492 = vmatpush1.xpose.msra.mxu0 0.0
        %493 = vmatprep.subr.mxu0 0.0
        %494 = vmatpush1.xpose.msra.mxu0 0.0
        %495 = vmatprep.subr.mxu0 0.0
        %496 = vmatpush1.xpose.msra.mxu0 0.0
        %497 = vmatprep.mubr.f32.mxu0 0.0
        %498 = vmatmul.mubr.f32.gmra.mrb[0].mxu0 %v428
        %v499 = vpop.f32.mrb[0].mxu0
        %v500 = vadd.f32 0.0, %v499
        %v501 = vpop.f32.mrb[0].mxu0
        %502 = vdwg.mxu0
        %v504 = vsel %vm426, %v421, 0
        %v507 = vsel %vm426, %v423, 0
        %509 = vmatprep.subr.mxu0 0.0
        %510 = vmatpush1.xpose.msra.mxu0 %v507
        %511 = vmatprep.subr.mxu0 0.0
        %512 = vmatpush1.xpose.msra.mxu0 0.0
        %513 = vmatprep.subr.mxu0 0.0
        %514 = vmatpush1.xpose.msra.mxu0 0.0
        %515 = vmatprep.subr.mxu0 0.0
        %516 = vmatpush1.xpose.msra.mxu0 0.0
        %517 = vmatprep.subr.mxu0 0.0
        %518 = vmatpush1.xpose.msra.mxu0 0.0
        %519 = vmatprep.subr.mxu0 0.0
        %520 = vmatpush1.xpose.msra.mxu0 0.0
        %521 = vmatprep.subr.mxu0 0.0
        %522 = vmatpush1.xpose.msra.mxu0 0.0
        %523 = vmatprep.subr.mxu0 0.0
        %524 = vmatpush1.xpose.msra.mxu0 0.0
        %525 = vmatprep.subr.mxu0 0.0
        %526 = vmatpush1.xpose.msra.mxu0 0.0
        %527 = vmatprep.subr.mxu0 0.0
        %528 = vmatpush1.xpose.msra.mxu0 0.0
        %529 = vmatprep.subr.mxu0 0.0
        %530 = vmatpush1.xpose.msra.mxu0 0.0
        %531 = vmatprep.subr.mxu0 0.0
        %532 = vmatpush1.xpose.msra.mxu0 0.0
        %533 = vmatprep.subr.mxu0 0.0
        %534 = vmatpush1.xpose.msra.mxu0 0.0
        %535 = vmatprep.subr.mxu0 0.0
        %536 = vmatpush1.xpose.msra.mxu0 0.0
        %537 = vmatprep.subr.mxu0 0.0
        %538 = vmatpush1.xpose.msra.mxu0 0.0
        %539 = vmatprep.subr.mxu0 0.0
        %540 = vmatpush1.xpose.msra.mxu0 0.0
        %541 = vmatprep.subr.mxu0 0.0
        %542 = vmatpush1.xpose.msra.mxu0 0.0
        %543 = vmatprep.subr.mxu0 0.0
        %544 = vmatpush1.xpose.msra.mxu0 0.0
        %545 = vmatprep.subr.mxu0 0.0
        %546 = vmatpush1.xpose.msra.mxu0 0.0
        %547 = vmatprep.subr.mxu0 0.0
        %548 = vmatpush1.xpose.msra.mxu0 0.0
        %549 = vmatprep.subr.mxu0 0.0
        %550 = vmatpush1.xpose.msra.mxu0 0.0
        %551 = vmatprep.subr.mxu0 0.0
        %552 = vmatpush1.xpose.msra.mxu0 0.0
        %553 = vmatprep.subr.mxu0 0.0
        %554 = vmatpush1.xpose.msra.mxu0 0.0
        %555 = vmatprep.subr.mxu0 0.0
        %556 = vmatpush1.xpose.msra.mxu0 0.0
        %557 = vmatprep.subr.mxu0 0.0
        %558 = vmatpush1.xpose.msra.mxu0 0.0
        %559 = vmatprep.subr.mxu0 0.0
        %560 = vmatpush1.xpose.msra.mxu0 0.0
        %561 = vmatprep.subr.mxu0 0.0
        %562 = vmatpush1.xpose.msra.mxu0 0.0
        %563 = vmatprep.subr.mxu0 0.0
        %564 = vmatpush1.xpose.msra.mxu0 0.0
        %565 = vmatprep.subr.mxu0 0.0
        %566 = vmatpush1.xpose.msra.mxu0 0.0
        %567 = vmatprep.subr.mxu0 0.0
        %568 = vmatpush1.xpose.msra.mxu0 0.0
        %569 = vmatprep.subr.mxu0 0.0
        %570 = vmatpush1.xpose.msra.mxu0 0.0
        %571 = vmatprep.subr.mxu0 0.0
        %572 = vmatpush1.xpose.msra.mxu0 0.0
        %573 = vmatprep.mubr.f32.mxu0 0.0
        %574 = vmatmul.mubr.f32.gmra.mrb[0].mxu0 %v504
        %v575 = vpop.f32.mrb[0].mxu0
        %v576 = vadd.f32 0.0, %v575
        %v577 = vpop.f32.mrb[0].mxu0
        %578 = vdwg.mxu0
        %v579 = vld [vmem:[%s366] sm:$0xff]
        %vm580 = vcmp.ne.f32.partialorder %v579, 0.0
        %v581 = vsel %vm580, 1, 0
        %vm582 = vcmp.eq.s32.totalorder %v581, 1
        %v583 = vsel %vm582, %v500, -1e+09
        %v584 = vsel %vm582, %v576, -1e+09
        %vm585 = vcmask 64512
        %v586 = vsel %vm585, %v583, -inf
        %587 = vmax.xlane.f32.xlu0 %v586
        %v588 = vpop.xlane.xlu0 %587
        %v589 = vsel %vm585, %v584, -inf
        %590 = vmax.xlane.f32.xlu0 %v589
        %v591 = vpop.xlane.xlu0 %590
        %v592 = vsub.f32 %v583, %v588
        %v593 = vsub.f32 %v584, %v591
        %v594 = vmul.f32 %v592, 1.442695
        %v595 = vpow.pop %v594
        %v596 = vmul.f32 %v593, 1.442695
        %v597 = vpow.pop %v596
        %v598 = vsel %vm585, %v595, 0.0
        %599 = vadd.xlane.f32.xlu0 %v598
        %v600 = vpop.xlane.xlu0 %599
        %v601 = vsel %vm585, %v597, 0.0
        %602 = vadd.xlane.f32.xlu0 %v601
        %v603 = vpop.xlane.xlu0 %602
        %v604 = vrcp.pop %v600
        %v605 = vmul.f32 1.0, %v604
        %v606 = vrcp.pop %v603
        %v607 = vmul.f32 1.0, %v606
        %v608 = vmul.f32 %v595, %v605
        %v609 = vmul.f32 %v597, %v607
        %v611 = vsel %vm585, %v608, 0
        %613 = vmatprep.subr.mxu0 0.0
        %614 = vmatpush1.msra.mxu0 %v424
        %615 = vmatprep.subr.mxu0 0.0
        %616 = vmatpush1.msra.mxu0 0.0
        %617 = vmatprep.subr.mxu0 0.0
        %618 = vmatpush1.msra.mxu0 0.0
        %619 = vmatprep.subr.mxu0 0.0
        %620 = vmatpush1.msra.mxu0 0.0
        %621 = vmatprep.subr.mxu0 0.0
        %622 = vmatpush1.msra.mxu0 0.0
        %623 = vmatprep.subr.mxu0 0.0
        %624 = vmatpush1.msra.mxu0 0.0
        %625 = vmatprep.subr.mxu0 0.0
        %626 = vmatpush1.msra.mxu0 0.0
        %627 = vmatprep.subr.mxu0 0.0
        %628 = vmatpush1.msra.mxu0 0.0
        %629 = vmatprep.subr.mxu0 0.0
        %630 = vmatpush1.msra.mxu0 0.0
        %631 = vmatprep.subr.mxu0 0.0
        %632 = vmatpush1.msra.mxu0 0.0
        %633 = vmatprep.subr.mxu0 0.0
        %634 = vmatpush1.msra.mxu0 0.0
        %635 = vmatprep.subr.mxu0 0.0
        %636 = vmatpush1.msra.mxu0 0.0
        %637 = vmatprep.subr.mxu0 0.0
        %638 = vmatpush1.msra.mxu0 0.0
        %639 = vmatprep.subr.mxu0 0.0
        %640 = vmatpush1.msra.mxu0 0.0
        %641 = vmatprep.subr.mxu0 0.0
        %642 = vmatpush1.msra.mxu0 0.0
        %643 = vmatprep.subr.mxu0 0.0
        %644 = vmatpush1.msra.mxu0 0.0
        %645 = vmatprep.subr.mxu0 0.0
        %646 = vmatpush1.msra.mxu0 0.0
        %647 = vmatprep.subr.mxu0 0.0
        %648 = vmatpush1.msra.mxu0 0.0
        %649 = vmatprep.subr.mxu0 0.0
        %650 = vmatpush1.msra.mxu0 0.0
        %651 = vmatprep.subr.mxu0 0.0
        %652 = vmatpush1.msra.mxu0 0.0
        %653 = vmatprep.subr.mxu0 0.0
        %654 = vmatpush1.msra.mxu0 0.0
        %655 = vmatprep.subr.mxu0 0.0
        %656 = vmatpush1.msra.mxu0 0.0
        %657 = vmatprep.subr.mxu0 0.0
        %658 = vmatpush1.msra.mxu0 0.0
        %659 = vmatprep.subr.mxu0 0.0
        %660 = vmatpush1.msra.mxu0 0.0
        %661 = vmatprep.subr.mxu0 0.0
        %662 = vmatpush1.msra.mxu0 0.0
        %663 = vmatprep.subr.mxu0 0.0
        %664 = vmatpush1.msra.mxu0 0.0
        %665 = vmatprep.subr.mxu0 0.0
        %666 = vmatpush1.msra.mxu0 0.0
        %667 = vmatprep.subr.mxu0 0.0
        %668 = vmatpush1.msra.mxu0 0.0
        %669 = vmatprep.subr.mxu0 0.0
        %670 = vmatpush1.msra.mxu0 0.0
        %671 = vmatprep.subr.mxu0 0.0
        %672 = vmatpush1.msra.mxu0 0.0
        %673 = vmatprep.subr.mxu0 0.0
        %674 = vmatpush1.msra.mxu0 0.0
        %675 = vmatprep.subr.mxu0 0.0
        %676 = vmatpush1.msra.mxu0 0.0
        %677 = vmatprep.mubr.f32.mxu0 0.0
        %678 = vmatmul.mubr.f32.gmra.mrb[0].mxu0 %v611
        %v679 = vpop.f32.mrb[0].mxu0
        %v680 = vadd.f32 0.0, %v679
        %v681 = vpop.f32.mrb[0].mxu0
        %682 = vdwg.mxu0
        %v684 = vsel %vm585, %v609, 0
        %686 = vmatprep.subr.mxu0 0.0
        %687 = vmatpush1.msra.mxu0 %v425
        %688 = vmatprep.subr.mxu0 0.0
        %689 = vmatpush1.msra.mxu0 0.0
        %690 = vmatprep.subr.mxu0 0.0
        %691 = vmatpush1.msra.mxu0 0.0
        %692 = vmatprep.subr.mxu0 0.0
        %693 = vmatpush1.msra.mxu0 0.0
        %694 = vmatprep.subr.mxu0 0.0
        %695 = vmatpush1.msra.mxu0 0.0
        %696 = vmatprep.subr.mxu0 0.0
        %697 = vmatpush1.msra.mxu0 0.0
        %698 = vmatprep.subr.mxu0 0.0
        %699 = vmatpush1.msra.mxu0 0.0
        %700 = vmatprep.subr.mxu0 0.0
        %701 = vmatpush1.msra.mxu0 0.0
        %702 = vmatprep.subr.mxu0 0.0
        %703 = vmatpush1.msra.mxu0 0.0
        %704 = vmatprep.subr.mxu0 0.0
        %705 = vmatpush1.msra.mxu0 0.0
        %706 = vmatprep.subr.mxu0 0.0
        %707 = vmatpush1.msra.mxu0 0.0
        %708 = vmatprep.subr.mxu0 0.0
        %709 = vmatpush1.msra.mxu0 0.0
        %710 = vmatprep.subr.mxu0 0.0
        %711 = vmatpush1.msra.mxu0 0.0
        %712 = vmatprep.subr.mxu0 0.0
        %713 = vmatpush1.msra.mxu0 0.0
        %714 = vmatprep.subr.mxu0 0.0
        %715 = vmatpush1.msra.mxu0 0.0
        %716 = vmatprep.subr.mxu0 0.0
        %717 = vmatpush1.msra.mxu0 0.0
        %718 = vmatprep.subr.mxu0 0.0
        %719 = vmatpush1.msra.mxu0 0.0
        %720 = vmatprep.subr.mxu0 0.0
        %721 = vmatpush1.msra.mxu0 0.0
        %722 = vmatprep.subr.mxu0 0.0
        %723 = vmatpush1.msra.mxu0 0.0
        %724 = vmatprep.subr.mxu0 0.0
        %725 = vmatpush1.msra.mxu0 0.0
        %726 = vmatprep.subr.mxu0 0.0
        %727 = vmatpush1.msra.mxu0 0.0
        %728 = vmatprep.subr.mxu0 0.0
        %729 = vmatpush1.msra.mxu0 0.0
        %730 = vmatprep.subr.mxu0 0.0
        %731 = vmatpush1.msra.mxu0 0.0
        %732 = vmatprep.subr.mxu0 0.0
        %733 = vmatpush1.msra.mxu0 0.0
        %734 = vmatprep.subr.mxu0 0.0
        %735 = vmatpush1.msra.mxu0 0.0
        %736 = vmatprep.subr.mxu0 0.0
        %737 = vmatpush1.msra.mxu0 0.0
        %738 = vmatprep.subr.mxu0 0.0
        %739 = vmatpush1.msra.mxu0 0.0
        %740 = vmatprep.subr.mxu0 0.0
        %741 = vmatpush1.msra.mxu0 0.0
        %742 = vmatprep.subr.mxu0 0.0
        %743 = vmatpush1.msra.mxu0 0.0
        %744 = vmatprep.subr.mxu0 0.0
        %745 = vmatpush1.msra.mxu0 0.0
        %746 = vmatprep.subr.mxu0 0.0
        %747 = vmatpush1.msra.mxu0 0.0
        %748 = vmatprep.subr.mxu0 0.0
        %749 = vmatpush1.msra.mxu0 0.0
        %750 = vmatprep.mubr.f32.mxu0 0.0
        %751 = vmatmul.mubr.f32.gmra.mrb[0].mxu0 %v684
        %v752 = vpop.f32.mrb[0].mxu0
        %v753 = vadd.f32 0.0, %v752
        %v754 = vpop.f32.mrb[0].mxu0
        %755 = vdwg.mxu0
        %756 = vst.msk [vmem:[%s405] sm:$0xff] %vm426, %v680
        %757 = vst.msk [vmem:[%s405 + $0x8] sm:$0xff] %vm426, %v753
        %758 = vst.msk [vmem:[%s412] sm:$0xff] %vm585, %v608
        %759 = vst.msk [vmem:[%s412 + $0x8] sm:$0xff] %vm585, %v609
        %s760 = sand.u32 %s177, 1
        %s761 = scalar_lea.sflag [#allocation4], %s760
        %s762 = sand.u32 %s177, 1
        %s763 = smul.addr %s762, 16
        %s764 = scalar_lea.vmem [#allocation10], %s763
        %s765 = sand.u32 %s207, 1
        %s766 = scalar_lea.sflag [#allocation12], %s765
        %s767 = sand.u32 %s207, 1
        %s768 = smul.addr %s767, 16
        %s769 = scalar_lea.vmem [#allocation11], %s768
        // Predicated region
        $region53: #{tpu_custom_call.1} parent=35 // pred_check
          %p770 = pneg %p187
        $region54: #{tpu_custom_call.1} parent=35 // pred_check_branch
          %772 = sbr.rel (%p770) target = $region56
        $region55: #{tpu_custom_call.1} parent=35 // pred_region
          %s773 = smul.u32 2, %s38
          %s775 = ssub.s32 256, 256
          %776 = vsyncadd %s761, %s775
          %s777 = sadd.s32 %s39, %s773
          %s778 = smul.addr %s37, 2
          %s779 = sadd.s32 %s777, %s778
          %s780 = smul.addr %s779, 128
          %s781 = scalar_lea.hbm %s4, %s780
          %s782 = sshll.u32 %s764, 4
          %s783 = int_to_ptr.vmem [resolvable:$true] %s782
          %788 = dma.vmem_to_hbm [thread:$0]  %s783, 256, %s781, %s761, 128, 128, 8
        $region56: #{tpu_custom_call.1} parent=35 // pred_fallthru
          _
        // Predicated region
        $region57: #{tpu_custom_call.1} parent=35 // pred_check
          %p789 = pneg %p217
        $region58: #{tpu_custom_call.1} parent=35 // pred_check_branch
          %791 = sbr.rel (%p789) target = $region60
        $region59: #{tpu_custom_call.1} parent=35 // pred_region
          %s792 = smul.u32 2, %s38
          %s794 = ssub.s32 256, 256
          %795 = vsyncadd %s766, %s794
          %s796 = sadd.s32 %s39, %s792
          %s797 = smul.addr %s37, 2
          %s798 = sadd.s32 %s796, %s797
          %s799 = smul.addr %s798, 128
          %s800 = scalar_lea.hbm %s5, %s799
          %s801 = sshll.u32 %s769, 4
          %s802 = int_to_ptr.vmem [resolvable:$true] %s801
          %807 = dma.vmem_to_hbm [thread:$0]  %s802, 256, %s800, %s766, 128, 128, 8
        $region60: #{tpu_custom_call.1} parent=35 // pred_fallthru
          _
      $region36: #{tpu_custom_call.1} parent=5 // pred_fallthru
        _
      %p808 = scmp.le.s32.totalorder 2, %s27
      // Predicated region
      $region61: #{tpu_custom_call.1} parent=5 // pred_check
        %p809 = pneg %p808
      $region62: #{tpu_custom_call.1} parent=5 // pred_check_branch
        %811 = sbr.rel (%p809) target = $region64
      $region63: #{tpu_custom_call.1} parent=5 // pred_region
        %s812 = ssub.s32 %s27, 2
        // Predicated region
        $region65: #{tpu_custom_call.1} parent=63 // pred_check
          %p813 = pneg %p193
        $region66: #{tpu_custom_call.1} parent=63 // pred_check_branch
          %815 = sbr.rel (%p813) target = $region68
        $region67: #{tpu_custom_call.1} parent=63 // pred_region
          %s816 = sand.u32 %s178, 1
          %s817 = scalar_lea.sflag [#allocation4], %s816
          %s818 = sand.u32 %s178, 1
          %s819 = smul.addr %s818, 16
          %s820 = scalar_lea.vmem [#allocation10], %s819
          %821 = dma.done %s817, 256
        $region68: #{tpu_custom_call.1} parent=63 // pred_fallthru
          _
        // Predicated region
        $region69: #{tpu_custom_call.1} parent=63 // pred_check
          %p822 = pneg %p223
        $region70: #{tpu_custom_call.1} parent=63 // pred_check_branch
          %824 = sbr.rel (%p822) target = $region72
        $region71: #{tpu_custom_call.1} parent=63 // pred_region
          %s825 = sand.u32 %s208, 1
          %s826 = scalar_lea.sflag [#allocation12], %s825
          %s827 = sand.u32 %s208, 1
          %s828 = smul.addr %s827, 16
          %s829 = scalar_lea.vmem [#allocation11], %s828
          %830 = dma.done %s826, 256
        $region72: #{tpu_custom_call.1} parent=63 // pred_fallthru
          _
      $region64: #{tpu_custom_call.1} parent=5 // pred_fallthru
        _
    $region6: #{tpu_custom_call.1} parent=1 // loop_footer
      %s31 = sadd.s32 1, %s27
    $region7: #{tpu_custom_call.1} parent=1 // loop_footer_branch
      %26 = sbr.rel target = $region3
    $region8: #{tpu_custom_call.1} parent=1 // loop_exit
      _
    %831 = vsyncpa [#allocation3], 1
    %s832 = scalar_lea.sflag [#allocation3], 1
    %833 = vsyncpa %s832, 1
    %834 = vsyncpa [#allocation6], 1
    %s835 = scalar_lea.sflag [#allocation6], 1
    %836 = vsyncpa %s835, 1
    %837 = vsyncpa [#allocation9], 1
    %s838 = scalar_lea.sflag [#allocation9], 1
    %839 = vsyncpa %s838, 1
    %840 = vsyncpa [#allocation4], 1
    %s841 = scalar_lea.sflag [#allocation4], 1
    %842 = vsyncpa %s841, 1
    %843 = vsyncpa [#allocation12], 1
    %s844 = scalar_lea.sflag [#allocation12], 1
    %845 = vsyncpa %s844, 1

</llo_original>
